<compile_context>
chip_gen: v5e
topology: v5e:2x2
jax: 0.10.0
libtpu: 0.0.40
codegen_flags: <defaults>
</compile_context>

<pallas_src>
import jax
import jax.numpy as jnp
from jax.experimental import pallas as pl
from jax.experimental.pallas import tpu as pltpu

# --------------------------- model configuration ----------------------------
B    = 4                 # batch
BB   = 2                 # batch elements folded into one grid step
NBLK = B // BB           # pallas grid size (marked "parallel")
T    = 64                # time samples
C    = 8                 # EEG channels
F1   = 8                 # cnn_temporal_kernels
DM   = 2                 # cnn_spatial_depth_multiplier
F2   = F1 * DM           # cnn_spatial_kernels == cnn_septemporal_kernels
K0   = 33                # cnn_temporal_kernelsize (time)
K2   = 17                # cnn_septemporal_kernelsize (time)
P1S  = 4                 # cnn_spatial_pool (time)
P3S  = 8                 # cnn_septemporal_pool (time)
TQ   = T // P1S          # 16
T32  = TQ // P3S         # 2
NRES = 5                 # residual depthwise blocks conv_2_5 .. conv_2_9
NCLS = 4                 # dense_n_neurons
D    = T32 * F2          # dense input size
EPS  = 1e-5              # BatchNorm eps

# row offsets inside the packed constant tables (shared by wrapper and kernel)
R512_BAND0, R512_SEL0        = 0, T                        # pk512 (96, 512)
R256_BANDS, R256_SELD        = 0, (1 + NRES) * TQ          # pk256 (128, 256)
R64_COL0, R64_WRD, R64_DMASK = 0, F1 * T, F1 * T + TQ      # pk64  (560, 64)
R16_P1, R16_COLD, R16_W1BD   = 0, T, T + F2 * TQ           # pk16  (352, 16)
R32_W3BD, R32_ROWSUM         = 0, BB * F2                  # pk32  (34, 32)
R8_COLN, R8_BIAS, R8_BD      = 0, NCLS * F2, NCLS * F2 + BB * F2   # pk8 (97, 8)


def _elu(v):
    return jnp.where(v > 0, v, jnp.exp(jnp.minimum(v, 0.0)) - 1.0)


# --------------------------------- kernel -----------------------------------
def eegnet_kernel(x_ref, pk512_ref, pk256_ref, pk64_ref, pk16_ref, pk32_ref,
                  pk8_ref, out_ref):
    dot = lambda a, b: jnp.dot(a, b, preferred_element_type=jnp.float32)

    # static views into the packed constant tables (zero-cost slices)
    band0 = pk512_ref[R512_BAND0:R512_BAND0 + T, :]          # (T, F1*T)
    sel0  = pk512_ref[R512_SEL0:R512_SEL0 + BB * F2, :]      # (BB*F2, F1*T)
    selD  = pk256_ref[R256_SELD:R256_SELD + BB * F2, :]      # (BB*F2, F2*TQ)
    col0  = pk64_ref[R64_COL0:R64_COL0 + F1 * T, :]          # (F1*T, T)
    wrd   = pk64_ref[R64_WRD:R64_WRD + TQ, :]                # (TQ, NCLS*F2)
    dmask = pk64_ref[R64_DMASK:R64_DMASK + BB * F2, :]       # (BB*F2, NCLS*F2)
    p1    = pk16_ref[R16_P1:R16_P1 + T, :]                   # (T, TQ)
    colD  = pk16_ref[R16_COLD:R16_COLD + F2 * TQ, :]         # (F2*TQ, TQ)
    w1bd  = pk16_ref[R16_W1BD:R16_W1BD + BB * F2, :]         # (BB*F2, BB*C)
    w3bd  = pk32_ref[R32_W3BD:R32_W3BD + BB * F2, :]         # (BB*F2, BB*F2)
    rowsb = pk32_ref[R32_ROWSUM:R32_ROWSUM + BB, :]          # (BB, BB*F2)
    colN  = pk8_ref[R8_COLN:R8_COLN + NCLS * F2, 0:NCLS]     # (NCLS*F2, NCLS)
    bcols = pk8_ref[R8_BIAS:R8_BIAS + BB * F2, :]            # (BB*F2, 8)
    bdrow = pk8_ref[R8_BD:R8_BD + 1, 0:NCLS]                 # (1, NCLS)

    x = x_ref[0]                                             # (BB*C, T)

    # conv_0 + bnorm_0 + conv_1 + bnorm_1 (linear parts folded): channel mix,
    # clipped-Toeplitz band (all F1 temporal kernels), group-select, collapse.
    u  = dot(w1bd, x)                                        # (BB*F2, T)
    h1 = dot(dot(u, band0) * sel0, col0) + bcols[:, 0:1]     # (BB*F2, T)
    z1 = _elu(h1)                                            # act_1
    pq = dot(z1, p1)                                         # pool_1 -> (BB*F2, TQ)

    def depthwise(v, j):
        # depthwise temporal conv j via apply-all-bands + select-mask + collapse
        band = pk256_ref[R256_BANDS + j * TQ:R256_BANDS + (j + 1) * TQ, :]
        return dot(dot(v, band) * selD, colD)                # (BB*F2, TQ)

    x2 = depthwise(pq, 0)                                    # conv_2 (no BN / act)
    for i in range(NRES):                                    # conv_2_5 .. conv_2_9
        y = _elu(depthwise(x2, 1 + i) + bcols[:, 2 + i:3 + i])
        x2 = y + x2                                          # residual add

    h3 = _elu(dot(w3bd, x2) + bcols[:, 1:2])                 # conv_3 + bnorm_3 + ELU

    # pool_3 + flatten + dense (folded into wrd), via a masked trace contraction
    s = dot(dot(h3, wrd) * dmask, colN)                      # (BB*F2, NCLS)
    logits = dot(rowsb, s) + bdrow                           # (BB, NCLS)

    m = jnp.max(logits, axis=-1, keepdims=True)              # log-softmax
    z = logits - m
    lse = jnp.log(jnp.sum(jnp.exp(z), axis=-1, keepdims=True))
    out_ref[0] = z - lse


# ------------------------- parameters & constants ---------------------------
def make_raw_params(key):
    cnt = [0]

    def nk():
        cnt[0] += 1
        return jax.random.fold_in(key, cnt[0])

    def normal(shape, s=0.1):
        return s * jax.random.normal(nk(), shape, jnp.float32)

    def unif(shape):
        return jax.random.uniform(nk(), shape, jnp.float32, minval=0.5, maxval=1.5)

    def bn(f):  # rows: gamma, beta, running_mean, running_var
        return jnp.stack([unif((f,)), normal((f,)), normal((f,)), unif((f,))], axis=0)

    def renorm(w, maxnorm):  # torch.renorm(p=2, dim=0) applied at setup time
        nrm = jnp.sqrt(jnp.sum(w * w, axis=tuple(range(1, w.ndim)), keepdims=True))
        return w * jnp.where(nrm > maxnorm, maxnorm / (nrm + 1e-7), 1.0)

    return dict(
        w0=normal((F1, K0)),                       # conv_0 temporal kernels
        bn0=bn(F1),
        w1=renorm(normal((F2, C)), 1.0),           # conv_1 (max_norm = 1.0)
        bn1=bn(F2),
        w2=normal((F2, K2)),                       # conv_2 depthwise temporal
        wr=normal((NRES, F2, 3, 3)),               # residual 3x3 depthwise kernels
        bnr=jnp.stack([bn(F2) for _ in range(NRES)], axis=0),   # (NRES, 4, F2)
        w3=normal((F2, F2)),                       # conv_3 pointwise
        b3=normal((F2,)),                          # conv_3 bias
        bn3=bn(F2),
        wd=renorm(normal((NCLS, D)), 0.25),        # dense (max_norm = 0.25)
        bd=normal((NCLS,)),
    )


def _depthwise_band(w, t_out, pad):
    """Clipped-Toeplitz band so that (x @ band)[r, f*t_out + t] equals
    sum_k w[f, k] * x[r, t + k - pad] with zeros outside [0, t_out)."""
    nf, nk = w.shape
    s = jnp.arange(t_out)[:, None]
    t = jnp.arange(t_out)[None, :]
    k = s - t + pad
    valid = (k >= 0) & (k < nk)
    taps = jnp.where(valid[None, :, :], w[:, jnp.clip(k, 0, nk - 1)], 0.0)
    return jnp.transpose(taps, (1, 0, 2)).reshape(t_out, nf * t_out).astype(jnp.float32)


def build_constants(raw):
    """Fold BatchNorms/biases and precompute every matmul operand the kernel
    needs; pack them (by lane width) into 6 f32 tables."""
    def fold(bn):
        s = bn[0] / jnp.sqrt(bn[3] + EPS)
        return s, bn[1] - bn[2] * s

    w0, w1, w2, w3 = raw["w0"], raw["w1"], raw["w2"], raw["w3"]
    wr3 = raw["wr"][..., 1]                         # centre spatial column
    s0, m0 = fold(raw["bn0"])
    s1, m1 = fold(raw["bn1"])
    s3, m3 = fold(raw["bn3"])
    srs = raw["bnr"][:, 0] / jnp.sqrt(raw["bnr"][:, 3] + EPS)
    mrs = raw["bnr"][:, 1] - raw["bnr"][:, 2] * srs
    grp = jnp.arange(F2) // DM
    eye = lambda n: jnp.eye(n, dtype=jnp.float32)

    # pk512: conv_0 band + (group-select * bn0*bn1 scale) mask
    band0 = _depthwise_band(w0, T, (K0 - 1) // 2)                           # (T, F1*T)
    sel0 = (grp[:, None] == jnp.arange(F1)[None, :]).astype(jnp.float32)
    sel0 = sel0 * (s0[grp] * s1)[:, None]
    sel0 = jnp.tile(jnp.repeat(sel0, T, axis=1), (BB, 1))                   # (BB*F2, F1*T)
    pk512 = jnp.concatenate([band0, sel0], axis=0)

    # pk256: depthwise bands (conv_2 + 5 residual convs, BN scale folded) + f2-select
    bands = [_depthwise_band(w2, TQ, (K2 - 1) // 2)]
    bands += [_depthwise_band(srs[i][:, None] * wr3[i], TQ, 1) for i in range(NRES)]
    selD = jnp.tile(jnp.repeat(eye(F2), TQ, axis=1), (BB, 1))               # (BB*F2, F2*TQ)
    pk256 = jnp.concatenate(bands + [selD], axis=0)

    # pk64: conv_0 collapse + dense weights (pool_3 folded, flatten pre-permuted) + diag mask
    col0 = jnp.tile(eye(T), (F1, 1))                                        # (F1*T, T)
    wd_r = raw["wd"].reshape(NCLS, T32, F2)
    wrd = jnp.transpose(wd_r[:, jnp.arange(TQ) // P3S, :] / P3S, (1, 0, 2))
    wrd = wrd.reshape(TQ, NCLS * F2)                                        # (TQ, NCLS*F2)
    dmask = jnp.tile(jnp.tile(eye(F2), (1, NCLS)), (BB, 1))                 # (BB*F2, NCLS*F2)
    pk64 = jnp.concatenate([col0, wrd, dmask], axis=0)

    # pk16: pool_1 matrix + depthwise collapse + conv_1 block-diag weights
    p1 = eye(TQ)[jnp.arange(T) // P1S] / P1S                                # (T, TQ)
    colD = jnp.tile(eye(TQ), (F2, 1))                                       # (F2*TQ, TQ)
    w1bd = jnp.kron(eye(BB), w1)                                            # (BB*F2, BB*C)
    pk16 = jnp.concatenate([p1, colD, w1bd], axis=0)

    # pk32: conv_3 (bn3 scale folded, block-diag over batch) + per-batch row sum
    w3bd = jnp.kron(eye(BB), s3[:, None] * w3)                              # (BB*F2, BB*F2)
    rowsb = jnp.repeat(eye(BB), F2, axis=1)                                 # (BB, BB*F2)
    pk32 = jnp.concatenate([w3bd, rowsb], axis=0)

    # pk8: class-collapse matrix, folded bias columns, dense bias row
    colN = jnp.pad(jnp.repeat(eye(NCLS), F2, axis=0), ((0, 0), (0, 8 - NCLS)))
    b1 = s1 * m0[grp] * jnp.sum(w1, axis=1) + m1                            # bn0/bn1 bias fold
    b3 = s3 * raw["b3"] + m3                                                # conv_3 bias + bn3
    bcols = jnp.stack([b1, b3] + [mrs[i] for i in range(NRES)]
                      + [jnp.zeros((F2,), jnp.float32)], axis=1)            # (F2, 8)
    bcols = jnp.tile(bcols, (BB, 1))                                        # (BB*F2, 8)
    bdrow = jnp.pad(raw["bd"].reshape(1, NCLS), ((0, 0), (0, 8 - NCLS)))
    pk8 = jnp.concatenate([colN, bcols, bdrow], axis=0)                     # (97, 8)

    return (pk512, pk256, pk64, pk16, pk32, pk8)


# -------------------------------- wrapper ------------------------------------
@jax.jit
def eegnet_forward(x, consts):
    """x: (B, time, EEG channel, 1) -> (B, NCLS) log-probabilities."""
    xk = jnp.transpose(x[..., 0], (0, 2, 1)).astype(jnp.float32)     # (B, C, T)
    xk = xk.reshape(NBLK, BB * C, T)                                 # batch block layout
    # constants use a constant index_map -> fetched once, never re-DMA'd
    rep = lambda a: pl.BlockSpec(a.shape, lambda i: (0, 0))
    out = pl.pallas_call(
        eegnet_kernel,
        out_shape=jax.ShapeDtypeStruct((NBLK, BB, NCLS), jnp.float32),
        grid_spec=pltpu.PrefetchScalarGridSpec(
            num_scalar_prefetch=0,
            grid=(NBLK,),
            in_specs=[pl.BlockSpec((1, BB * C, T), lambda i: (i, 0, 0))]
                     + [rep(a) for a in consts],
            out_specs=pl.BlockSpec((1, BB, NCLS), lambda i: (i, 0, 0)),
        ),
        compiler_params=pltpu.CompilerParams(
            dimension_semantics=("parallel",)),   # batch-block axis -> v7x megacore
    )(xk, *consts)
    return out.reshape(B, NCLS)


# --------------------- pure-JAX reference (for checking) --------------------
@jax.jit
def eegnet_reference(x, raw):
    def bn(v, p, axis):
        shape = [1] * v.ndim
        shape[axis] = -1
        g, b, mu, var = (p[i].reshape(shape) for i in range(4))
        return (v - mu) * (g / jnp.sqrt(var + EPS)) + b

    xb = jnp.transpose(x[..., 0], (0, 2, 1)).astype(jnp.float32)     # (B, C, T)
    pad0 = (K0 - 1) // 2
    xp = jnp.pad(xb, ((0, 0), (0, 0), (pad0, pad0)))
    g = jnp.zeros((B, F1, C, T), jnp.float32)
    for k in range(K0):                                              # conv_0
        g = g + raw["w0"][None, :, None, k:k + 1] * xp[:, None, :, k:k + T]
    g = bn(g, raw["bn0"], 1)                                         # bnorm_0
    grp = jnp.arange(F2) // DM
    h1 = jnp.einsum("fc,bfct->bft", raw["w1"], g[:, grp, :, :])      # conv_1
    h1 = jax.nn.elu(bn(h1, raw["bn1"], 1))                           # bnorm_1 + ELU
    h1 = h1.reshape(B, F2, TQ, P1S).mean(axis=-1)                    # pool_1
    pad2 = (K2 - 1) // 2
    hp = jnp.pad(h1, ((0, 0), (0, 0), (pad2, pad2)))
    x2 = jnp.zeros((B, F2, TQ), jnp.float32)
    for k in range(K2):                                              # conv_2
        x2 = x2 + raw["w2"][None, :, k:k + 1] * hp[:, :, k:k + TQ]
    wr3 = raw["wr"][..., 1]
    for i in range(NRES):                                            # residual blocks
        res = x2
        xpp = jnp.pad(x2, ((0, 0), (0, 0), (1, 1)))
        y = jnp.zeros_like(x2)
        for k in range(3):
            y = y + wr3[i][None, :, k:k + 1] * xpp[:, :, k:k + TQ]
        y = jax.nn.elu(bn(y, raw["bnr"][i], 1))
        x2 = y + res
    h3 = jnp.einsum("gf,bft->bgt", raw["w3"], x2) + raw["b3"][None, :, None]
    h3 = jax.nn.elu(bn(h3, raw["bn3"], 1))                           # conv_3 + bnorm_3 + ELU
    h4 = h3.reshape(B, F2, T32, P3S).mean(axis=-1)                   # pool_3
    flat = jnp.transpose(h4, (0, 2, 1)).reshape(B, T32 * F2)         # torch flatten order
    logits = flat @ raw["wd"].T + raw["bd"][None, :]
    return jax.nn.log_softmax(logits, axis=-1)


if __name__ == "__main__":
    key = jax.random.PRNGKey(0)
    raw = make_raw_params(jax.random.fold_in(key, 1))
    consts = build_constants(raw)
    x = jax.random.normal(jax.random.fold_in(key, 2), (B, T, C, 1), jnp.float32)

    out = jax.block_until_ready(eegnet_forward(x, consts))
    ref = jax.block_until_ready(eegnet_reference(x, raw))

    assert out.shape == (B, NCLS)
    assert bool(jnp.all(jnp.isfinite(out)))
    err = float(jnp.max(jnp.abs(out - ref)))
    assert err < 5e-2, f"kernel/reference mismatch: max |diff| = {err}"
    print("KERNEL_OK")
</pallas_src>

<mosaic_0001>
module attributes {stable_mosaic.version = 11 : i64} {
  func.func @eegnet_kernel(%arg0: i32, %arg1: memref<1x16x64xf32, #tpu.memory_space<vmem>>, %arg2: memref<96x512xf32, #tpu.memory_space<vmem>>, %arg3: memref<128x256xf32, #tpu.memory_space<vmem>>, %arg4: memref<560x64xf32, #tpu.memory_space<vmem>>, %arg5: memref<352x16xf32, #tpu.memory_space<vmem>>, %arg6: memref<34x32xf32, #tpu.memory_space<vmem>>, %arg7: memref<97x8xf32, #tpu.memory_space<vmem>>, %arg8: memref<1x2x4xf32, #tpu.memory_space<vmem>>) attributes {dimension_semantics = [#tpu.dimension_semantics<parallel>], iteration_bounds = array<i64: 2>, scalar_prefetch = 0 : i64, scratch_operands = 0 : i64, tpu.core_type = #tpu.core_type<tc>, window_params = [{transform_indices = @transform_0, window_bounds = array<i64: 1, 16, 64>}, {pipeline_mode = #tpu.pipeline_mode<synchronous>, transform_indices = @transform_1, window_bounds = array<i64: 96, 512>}, {pipeline_mode = #tpu.pipeline_mode<synchronous>, transform_indices = @transform_2, window_bounds = array<i64: 128, 256>}, {pipeline_mode = #tpu.pipeline_mode<synchronous>, transform_indices = @transform_3, window_bounds = array<i64: 560, 64>}, {pipeline_mode = #tpu.pipeline_mode<synchronous>, transform_indices = @transform_4, window_bounds = array<i64: 352, 16>}, {pipeline_mode = #tpu.pipeline_mode<synchronous>, transform_indices = @transform_5, window_bounds = array<i64: 34, 32>}, {pipeline_mode = #tpu.pipeline_mode<synchronous>, transform_indices = @transform_6, window_bounds = array<i64: 97, 8>}, {transform_indices = @transform_7, window_bounds = array<i64: 1, 2, 4>}]} {
    %c0 = arith.constant 0 : index
    %c0_0 = arith.constant 0 : index
    %0 = vector.load %arg2[%c0, %c0_0] : memref<96x512xf32, #tpu.memory_space<vmem>>, vector<64x512xf32>
    %c64 = arith.constant 64 : index
    %c0_1 = arith.constant 0 : index
    %1 = vector.load %arg2[%c64, %c0_1] : memref<96x512xf32, #tpu.memory_space<vmem>>, vector<32x512xf32>
    %c96 = arith.constant 96 : index
    %c0_2 = arith.constant 0 : index
    %2 = vector.load %arg3[%c96, %c0_2] : memref<128x256xf32, #tpu.memory_space<vmem>>, vector<32x256xf32>
    %c0_3 = arith.constant 0 : index
    %c0_4 = arith.constant 0 : index
    %3 = vector.load %arg4[%c0_3, %c0_4] : memref<560x64xf32, #tpu.memory_space<vmem>>, vector<512x64xf32>
    %c512 = arith.constant 512 : index
    %c0_5 = arith.constant 0 : index
    %4 = vector.load %arg4[%c512, %c0_5] : memref<560x64xf32, #tpu.memory_space<vmem>>, vector<16x64xf32>
    %c528 = arith.constant 528 : index
    %c0_6 = arith.constant 0 : index
    %5 = vector.load %arg4[%c528, %c0_6] : memref<560x64xf32, #tpu.memory_space<vmem>>, vector<32x64xf32>
    %c0_7 = arith.constant 0 : index
    %c0_8 = arith.constant 0 : index
    %6 = vector.load %arg5[%c0_7, %c0_8] : memref<352x16xf32, #tpu.memory_space<vmem>>, vector<64x16xf32>
    %c64_9 = arith.constant 64 : index
    %c0_10 = arith.constant 0 : index
    %7 = vector.load %arg5[%c64_9, %c0_10] : memref<352x16xf32, #tpu.memory_space<vmem>>, vector<256x16xf32>
    %c320 = arith.constant 320 : index
    %c0_11 = arith.constant 0 : index
    %8 = vector.load %arg5[%c320, %c0_11] : memref<352x16xf32, #tpu.memory_space<vmem>>, vector<32x16xf32>
    %c0_12 = arith.constant 0 : index
    %c0_13 = arith.constant 0 : index
    %9 = vector.load %arg6[%c0_12, %c0_13] : memref<34x32xf32, #tpu.memory_space<vmem>>, vector<32x32xf32>
    %c32 = arith.constant 32 : index
    %c0_14 = arith.constant 0 : index
    %10 = vector.load %arg6[%c32, %c0_14] : memref<34x32xf32, #tpu.memory_space<vmem>>, vector<2x32xf32>
    %c0_15 = arith.constant 0 : index
    %c0_16 = arith.constant 0 : index
    %11 = vector.load %arg7[%c0_15, %c0_16] : memref<97x8xf32, #tpu.memory_space<vmem>>, vector<64x4xf32>
    %c64_17 = arith.constant 64 : index
    %c0_18 = arith.constant 0 : index
    %12 = vector.load %arg7[%c64_17, %c0_18] : memref<97x8xf32, #tpu.memory_space<vmem>>, vector<32x8xf32>
    %c96_19 = arith.constant 96 : index
    %c0_20 = arith.constant 0 : index
    %13 = vector.load %arg7[%c96_19, %c0_20] : memref<97x8xf32, #tpu.memory_space<vmem>>, vector<1x4xf32>
    %c0_21 = arith.constant 0 : index
    %c0_22 = arith.constant 0 : index
    %c0_23 = arith.constant 0 : index
    %14 = vector.load %arg1[%c0_21, %c0_22, %c0_23] : memref<1x16x64xf32, #tpu.memory_space<vmem>>, vector<1x16x64xf32>
    %15 = vector.shape_cast %14 : vector<1x16x64xf32> to vector<16x64xf32>
    %cst = arith.constant dense<0.000000e+00> : vector<32x64xf32>
    %16 = tpu.matmul %8, %15, %cst {dimension_numbers = #tpu.dot_dimension_numbers<[1], [0], [0], [1], [0, 0, 1, 1], [], []>} : vector<32x16xf32>, vector<16x64xf32>, vector<32x64xf32> -> vector<32x64xf32>
    %cst_24 = arith.constant dense<0.000000e+00> : vector<32x512xf32>
    %17 = tpu.matmul %16, %0, %cst_24 {dimension_numbers = #tpu.dot_dimension_numbers<[1], [0], [0], [1], [0, 0, 1, 1], [], []>} : vector<32x64xf32>, vector<64x512xf32>, vector<32x512xf32> -> vector<32x512xf32>
    %18 = arith.mulf %17, %1 : vector<32x512xf32>
    %cst_25 = arith.constant dense<0.000000e+00> : vector<32x64xf32>
    %19 = tpu.matmul %18, %3, %cst_25 {dimension_numbers = #tpu.dot_dimension_numbers<[1], [0], [0], [1], [0, 0, 1, 1], [], []>} : vector<32x512xf32>, vector<512x64xf32>, vector<32x64xf32> -> vector<32x64xf32>
    %20 = vector.extract_strided_slice %12 {offsets = [0, 0], sizes = [32, 1], strides = [1, 1]} : vector<32x8xf32> to vector<32x1xf32>
    %21 = vector.broadcast %20 : vector<32x1xf32> to vector<32x64xf32>
    %22 = arith.addf %19, %21 : vector<32x64xf32>
    %cst_26 = arith.constant 0.000000e+00 : f32
    %23 = vector.broadcast %cst_26 : f32 to vector<32x64xf32>
    %24 = arith.cmpf ogt, %22, %23 : vector<32x64xf32>
    %cst_27 = arith.constant 0.000000e+00 : f32
    %25 = vector.broadcast %cst_27 : f32 to vector<32x64xf32>
    %26 = arith.minimumf %22, %25 : vector<32x64xf32>
    %27 = math.exp %26 : vector<32x64xf32>
    %cst_28 = arith.constant 1.000000e+00 : f32
    %28 = vector.broadcast %cst_28 : f32 to vector<32x64xf32>
    %29 = arith.subf %27, %28 : vector<32x64xf32>
    %30 = arith.select %24, %22, %29 : vector<32x64xi1>, vector<32x64xf32>
    %cst_29 = arith.constant dense<0.000000e+00> : vector<32x16xf32>
    %31 = tpu.matmul %30, %6, %cst_29 {dimension_numbers = #tpu.dot_dimension_numbers<[1], [0], [0], [1], [0, 0, 1, 1], [], []>} : vector<32x64xf32>, vector<64x16xf32>, vector<32x16xf32> -> vector<32x16xf32>
    %c0_30 = arith.constant 0 : index
    %c0_31 = arith.constant 0 : index
    %32 = vector.load %arg3[%c0_30, %c0_31] : memref<128x256xf32, #tpu.memory_space<vmem>>, vector<16x256xf32>
    %cst_32 = arith.constant dense<0.000000e+00> : vector<32x256xf32>
    %33 = tpu.matmul %31, %32, %cst_32 {dimension_numbers = #tpu.dot_dimension_numbers<[1], [0], [0], [1], [0, 0, 1, 1], [], []>} : vector<32x16xf32>, vector<16x256xf32>, vector<32x256xf32> -> vector<32x256xf32>
    %34 = arith.mulf %33, %2 : vector<32x256xf32>
    %cst_33 = arith.constant dense<0.000000e+00> : vector<32x16xf32>
    %35 = tpu.matmul %34, %7, %cst_33 {dimension_numbers = #tpu.dot_dimension_numbers<[1], [0], [0], [1], [0, 0, 1, 1], [], []>} : vector<32x256xf32>, vector<256x16xf32>, vector<32x16xf32> -> vector<32x16xf32>
    %c16 = arith.constant 16 : index
    %c0_34 = arith.constant 0 : index
    %36 = vector.load %arg3[%c16, %c0_34] : memref<128x256xf32, #tpu.memory_space<vmem>>, vector<16x256xf32>
    %cst_35 = arith.constant dense<0.000000e+00> : vector<32x256xf32>
    %37 = tpu.matmul %35, %36, %cst_35 {dimension_numbers = #tpu.dot_dimension_numbers<[1], [0], [0], [1], [0, 0, 1, 1], [], []>} : vector<32x16xf32>, vector<16x256xf32>, vector<32x256xf32> -> vector<32x256xf32>
    %38 = arith.mulf %37, %2 : vector<32x256xf32>
    %cst_36 = arith.constant dense<0.000000e+00> : vector<32x16xf32>
    %39 = tpu.matmul %38, %7, %cst_36 {dimension_numbers = #tpu.dot_dimension_numbers<[1], [0], [0], [1], [0, 0, 1, 1], [], []>} : vector<32x256xf32>, vector<256x16xf32>, vector<32x16xf32> -> vector<32x16xf32>
    %40 = vector.extract_strided_slice %12 {offsets = [0, 2], sizes = [32, 1], strides = [1, 1]} : vector<32x8xf32> to vector<32x1xf32>
    %41 = vector.broadcast %40 : vector<32x1xf32> to vector<32x16xf32>
    %42 = arith.addf %39, %41 : vector<32x16xf32>
    %cst_37 = arith.constant 0.000000e+00 : f32
    %43 = vector.broadcast %cst_37 : f32 to vector<32x16xf32>
    %44 = arith.cmpf ogt, %42, %43 : vector<32x16xf32>
    %cst_38 = arith.constant 0.000000e+00 : f32
    %45 = vector.broadcast %cst_38 : f32 to vector<32x16xf32>
    %46 = arith.minimumf %42, %45 : vector<32x16xf32>
    %47 = math.exp %46 : vector<32x16xf32>
    %cst_39 = arith.constant 1.000000e+00 : f32
    %48 = vector.broadcast %cst_39 : f32 to vector<32x16xf32>
    %49 = arith.subf %47, %48 : vector<32x16xf32>
    %50 = arith.select %44, %42, %49 : vector<32x16xi1>, vector<32x16xf32>
    %51 = arith.addf %50, %35 : vector<32x16xf32>
    %c32_40 = arith.constant 32 : index
    %c0_41 = arith.constant 0 : index
    %52 = vector.load %arg3[%c32_40, %c0_41] : memref<128x256xf32, #tpu.memory_space<vmem>>, vector<16x256xf32>
    %cst_42 = arith.constant dense<0.000000e+00> : vector<32x256xf32>
    %53 = tpu.matmul %51, %52, %cst_42 {dimension_numbers = #tpu.dot_dimension_numbers<[1], [0], [0], [1], [0, 0, 1, 1], [], []>} : vector<32x16xf32>, vector<16x256xf32>, vector<32x256xf32> -> vector<32x256xf32>
    %54 = arith.mulf %53, %2 : vector<32x256xf32>
    %cst_43 = arith.constant dense<0.000000e+00> : vector<32x16xf32>
    %55 = tpu.matmul %54, %7, %cst_43 {dimension_numbers = #tpu.dot_dimension_numbers<[1], [0], [0], [1], [0, 0, 1, 1], [], []>} : vector<32x256xf32>, vector<256x16xf32>, vector<32x16xf32> -> vector<32x16xf32>
    %56 = vector.extract_strided_slice %12 {offsets = [0, 3], sizes = [32, 1], strides = [1, 1]} : vector<32x8xf32> to vector<32x1xf32>
    %57 = vector.broadcast %56 : vector<32x1xf32> to vector<32x16xf32>
    %58 = arith.addf %55, %57 : vector<32x16xf32>
    %cst_44 = arith.constant 0.000000e+00 : f32
    %59 = vector.broadcast %cst_44 : f32 to vector<32x16xf32>
    %60 = arith.cmpf ogt, %58, %59 : vector<32x16xf32>
    %cst_45 = arith.constant 0.000000e+00 : f32
    %61 = vector.broadcast %cst_45 : f32 to vector<32x16xf32>
    %62 = arith.minimumf %58, %61 : vector<32x16xf32>
    %63 = math.exp %62 : vector<32x16xf32>
    %cst_46 = arith.constant 1.000000e+00 : f32
    %64 = vector.broadcast %cst_46 : f32 to vector<32x16xf32>
    %65 = arith.subf %63, %64 : vector<32x16xf32>
    %66 = arith.select %60, %58, %65 : vector<32x16xi1>, vector<32x16xf32>
    %67 = arith.addf %66, %51 : vector<32x16xf32>
    %c48 = arith.constant 48 : index
    %c0_47 = arith.constant 0 : index
    %68 = vector.load %arg3[%c48, %c0_47] : memref<128x256xf32, #tpu.memory_space<vmem>>, vector<16x256xf32>
    %cst_48 = arith.constant dense<0.000000e+00> : vector<32x256xf32>
    %69 = tpu.matmul %67, %68, %cst_48 {dimension_numbers = #tpu.dot_dimension_numbers<[1], [0], [0], [1], [0, 0, 1, 1], [], []>} : vector<32x16xf32>, vector<16x256xf32>, vector<32x256xf32> -> vector<32x256xf32>
    %70 = arith.mulf %69, %2 : vector<32x256xf32>
    %cst_49 = arith.constant dense<0.000000e+00> : vector<32x16xf32>
    %71 = tpu.matmul %70, %7, %cst_49 {dimension_numbers = #tpu.dot_dimension_numbers<[1], [0], [0], [1], [0, 0, 1, 1], [], []>} : vector<32x256xf32>, vector<256x16xf32>, vector<32x16xf32> -> vector<32x16xf32>
    %72 = vector.extract_strided_slice %12 {offsets = [0, 4], sizes = [32, 1], strides = [1, 1]} : vector<32x8xf32> to vector<32x1xf32>
    %73 = vector.broadcast %72 : vector<32x1xf32> to vector<32x16xf32>
    %74 = arith.addf %71, %73 : vector<32x16xf32>
    %cst_50 = arith.constant 0.000000e+00 : f32
    %75 = vector.broadcast %cst_50 : f32 to vector<32x16xf32>
    %76 = arith.cmpf ogt, %74, %75 : vector<32x16xf32>
    %cst_51 = arith.constant 0.000000e+00 : f32
    %77 = vector.broadcast %cst_51 : f32 to vector<32x16xf32>
    %78 = arith.minimumf %74, %77 : vector<32x16xf32>
    %79 = math.exp %78 : vector<32x16xf32>
    %cst_52 = arith.constant 1.000000e+00 : f32
    %80 = vector.broadcast %cst_52 : f32 to vector<32x16xf32>
    %81 = arith.subf %79, %80 : vector<32x16xf32>
    %82 = arith.select %76, %74, %81 : vector<32x16xi1>, vector<32x16xf32>
    %83 = arith.addf %82, %67 : vector<32x16xf32>
    %c64_53 = arith.constant 64 : index
    %c0_54 = arith.constant 0 : index
    %84 = vector.load %arg3[%c64_53, %c0_54] : memref<128x256xf32, #tpu.memory_space<vmem>>, vector<16x256xf32>
    %cst_55 = arith.constant dense<0.000000e+00> : vector<32x256xf32>
    %85 = tpu.matmul %83, %84, %cst_55 {dimension_numbers = #tpu.dot_dimension_numbers<[1], [0], [0], [1], [0, 0, 1, 1], [], []>} : vector<32x16xf32>, vector<16x256xf32>, vector<32x256xf32> -> vector<32x256xf32>
    %86 = arith.mulf %85, %2 : vector<32x256xf32>
    %cst_56 = arith.constant dense<0.000000e+00> : vector<32x16xf32>
    %87 = tpu.matmul %86, %7, %cst_56 {dimension_numbers = #tpu.dot_dimension_numbers<[1], [0], [0], [1], [0, 0, 1, 1], [], []>} : vector<32x256xf32>, vector<256x16xf32>, vector<32x16xf32> -> vector<32x16xf32>
    %88 = vector.extract_strided_slice %12 {offsets = [0, 5], sizes = [32, 1], strides = [1, 1]} : vector<32x8xf32> to vector<32x1xf32>
    %89 = vector.broadcast %88 : vector<32x1xf32> to vector<32x16xf32>
    %90 = arith.addf %87, %89 : vector<32x16xf32>
    %cst_57 = arith.constant 0.000000e+00 : f32
    %91 = vector.broadcast %cst_57 : f32 to vector<32x16xf32>
    %92 = arith.cmpf ogt, %90, %91 : vector<32x16xf32>
    %cst_58 = arith.constant 0.000000e+00 : f32
    %93 = vector.broadcast %cst_58 : f32 to vector<32x16xf32>
    %94 = arith.minimumf %90, %93 : vector<32x16xf32>
    %95 = math.exp %94 : vector<32x16xf32>
    %cst_59 = arith.constant 1.000000e+00 : f32
    %96 = vector.broadcast %cst_59 : f32 to vector<32x16xf32>
    %97 = arith.subf %95, %96 : vector<32x16xf32>
    %98 = arith.select %92, %90, %97 : vector<32x16xi1>, vector<32x16xf32>
    %99 = arith.addf %98, %83 : vector<32x16xf32>
    %c80 = arith.constant 80 : index
    %c0_60 = arith.constant 0 : index
    %100 = vector.load %arg3[%c80, %c0_60] : memref<128x256xf32, #tpu.memory_space<vmem>>, vector<16x256xf32>
    %cst_61 = arith.constant dense<0.000000e+00> : vector<32x256xf32>
    %101 = tpu.matmul %99, %100, %cst_61 {dimension_numbers = #tpu.dot_dimension_numbers<[1], [0], [0], [1], [0, 0, 1, 1], [], []>} : vector<32x16xf32>, vector<16x256xf32>, vector<32x256xf32> -> vector<32x256xf32>
    %102 = arith.mulf %101, %2 : vector<32x256xf32>
    %cst_62 = arith.constant dense<0.000000e+00> : vector<32x16xf32>
    %103 = tpu.matmul %102, %7, %cst_62 {dimension_numbers = #tpu.dot_dimension_numbers<[1], [0], [0], [1], [0, 0, 1, 1], [], []>} : vector<32x256xf32>, vector<256x16xf32>, vector<32x16xf32> -> vector<32x16xf32>
    %104 = vector.extract_strided_slice %12 {offsets = [0, 6], sizes = [32, 1], strides = [1, 1]} : vector<32x8xf32> to vector<32x1xf32>
    %105 = vector.broadcast %104 : vector<32x1xf32> to vector<32x16xf32>
    %106 = arith.addf %103, %105 : vector<32x16xf32>
    %cst_63 = arith.constant 0.000000e+00 : f32
    %107 = vector.broadcast %cst_63 : f32 to vector<32x16xf32>
    %108 = arith.cmpf ogt, %106, %107 : vector<32x16xf32>
    %cst_64 = arith.constant 0.000000e+00 : f32
    %109 = vector.broadcast %cst_64 : f32 to vector<32x16xf32>
    %110 = arith.minimumf %106, %109 : vector<32x16xf32>
    %111 = math.exp %110 : vector<32x16xf32>
    %cst_65 = arith.constant 1.000000e+00 : f32
    %112 = vector.broadcast %cst_65 : f32 to vector<32x16xf32>
    %113 = arith.subf %111, %112 : vector<32x16xf32>
    %114 = arith.select %108, %106, %113 : vector<32x16xi1>, vector<32x16xf32>
    %115 = arith.addf %114, %99 : vector<32x16xf32>
    %cst_66 = arith.constant dense<0.000000e+00> : vector<32x16xf32>
    %116 = tpu.matmul %9, %115, %cst_66 {dimension_numbers = #tpu.dot_dimension_numbers<[1], [0], [0], [1], [0, 0, 1, 1], [], []>} : vector<32x32xf32>, vector<32x16xf32>, vector<32x16xf32> -> vector<32x16xf32>
    %117 = vector.extract_strided_slice %12 {offsets = [0, 1], sizes = [32, 1], strides = [1, 1]} : vector<32x8xf32> to vector<32x1xf32>
    %118 = vector.broadcast %117 : vector<32x1xf32> to vector<32x16xf32>
    %119 = arith.addf %116, %118 : vector<32x16xf32>
    %cst_67 = arith.constant 0.000000e+00 : f32
    %120 = vector.broadcast %cst_67 : f32 to vector<32x16xf32>
    %121 = arith.cmpf ogt, %119, %120 : vector<32x16xf32>
    %cst_68 = arith.constant 0.000000e+00 : f32
    %122 = vector.broadcast %cst_68 : f32 to vector<32x16xf32>
    %123 = arith.minimumf %119, %122 : vector<32x16xf32>
    %124 = math.exp %123 : vector<32x16xf32>
    %cst_69 = arith.constant 1.000000e+00 : f32
    %125 = vector.broadcast %cst_69 : f32 to vector<32x16xf32>
    %126 = arith.subf %124, %125 : vector<32x16xf32>
    %127 = arith.select %121, %119, %126 : vector<32x16xi1>, vector<32x16xf32>
    %cst_70 = arith.constant dense<0.000000e+00> : vector<32x64xf32>
    %128 = tpu.matmul %127, %4, %cst_70 {dimension_numbers = #tpu.dot_dimension_numbers<[1], [0], [0], [1], [0, 0, 1, 1], [], []>} : vector<32x16xf32>, vector<16x64xf32>, vector<32x64xf32> -> vector<32x64xf32>
    %129 = arith.mulf %128, %5 : vector<32x64xf32>
    %cst_71 = arith.constant dense<0.000000e+00> : vector<32x4xf32>
    %130 = tpu.matmul %129, %11, %cst_71 {dimension_numbers = #tpu.dot_dimension_numbers<[1], [0], [0], [1], [0, 0, 1, 1], [], []>} : vector<32x64xf32>, vector<64x4xf32>, vector<32x4xf32> -> vector<32x4xf32>
    %cst_72 = arith.constant dense<0.000000e+00> : vector<2x4xf32>
    %131 = tpu.matmul %10, %130, %cst_72 {dimension_numbers = #tpu.dot_dimension_numbers<[1], [0], [0], [1], [0, 0, 1, 1], [], []>} : vector<2x32xf32>, vector<32x4xf32>, vector<2x4xf32> -> vector<2x4xf32>
    %132 = vector.broadcast %13 : vector<1x4xf32> to vector<2x4xf32>
    %133 = arith.addf %131, %132 : vector<2x4xf32>
    %cst_73 = arith.constant dense<0xFF800000> : vector<2xf32>
    %134 = vector.multi_reduction <maximumf>, %133, %cst_73 [1] : vector<2x4xf32> to vector<2xf32>
    %135 = vector.shape_cast %134 : vector<2xf32> to vector<2x1xf32>
    %136 = vector.broadcast %135 : vector<2x1xf32> to vector<2x4xf32>
    %137 = arith.subf %133, %136 : vector<2x4xf32>
    %138 = math.exp %137 : vector<2x4xf32>
    %cst_74 = arith.constant dense<0.000000e+00> : vector<2xf32>
    %139 = vector.multi_reduction <add>, %138, %cst_74 [1] : vector<2x4xf32> to vector<2xf32>
    %140 = vector.shape_cast %139 : vector<2xf32> to vector<2x1xf32>
    %141 = math.log %140 : vector<2x1xf32>
    %142 = vector.broadcast %141 : vector<2x1xf32> to vector<2x4xf32>
    %143 = arith.subf %137, %142 : vector<2x4xf32>
    %c0_75 = arith.constant 0 : index
    %c0_76 = arith.constant 0 : index
    %c0_77 = arith.constant 0 : index
    %144 = vector.load %arg8[%c0_75, %c0_76, %c0_77] : memref<1x2x4xf32, #tpu.memory_space<vmem>>, vector<1x2x4xf32>
    %145 = vector.shape_cast %144 : vector<1x2x4xf32> to vector<2x4xf32>
    %146 = vector.shape_cast %143 : vector<2x4xf32> to vector<1x2x4xf32>
    tpu.vector_store %arg8[%c0_75, %c0_76, %c0_77], %146 {strides = array<i32>} : memref<1x2x4xf32, #tpu.memory_space<vmem>>, vector<1x2x4xf32>,
    return
  }
  func.func @transform_0(%arg0: i32) -> (i32, i32, i32) {
    %c0_i32 = arith.constant 0 : i32
    %c0_i32_0 = arith.constant 0 : i32
    %c0_i32_1 = arith.constant 0 : i32
    return %arg0, %c0_i32, %c0_i32_0 : i32, i32, i32
  }
  func.func @transform_1(%arg0: i32) -> (i32, i32) {
    %c0_i32 = arith.constant 0 : i32
    %c0_i32_0 = arith.constant 0 : i32
    %c0_i32_1 = arith.constant 0 : i32
    return %c0_i32, %c0_i32_0 : i32, i32
  }
  func.func @transform_2(%arg0: i32) -> (i32, i32) {
    %c0_i32 = arith.constant 0 : i32
    %c0_i32_0 = arith.constant 0 : i32
    %c0_i32_1 = arith.constant 0 : i32
    return %c0_i32, %c0_i32_0 : i32, i32
  }
  func.func @transform_3(%arg0: i32) -> (i32, i32) {
    %c0_i32 = arith.constant 0 : i32
    %c0_i32_0 = arith.constant 0 : i32
    %c0_i32_1 = arith.constant 0 : i32
    return %c0_i32, %c0_i32_0 : i32, i32
  }
  func.func @transform_4(%arg0: i32) -> (i32, i32) {
    %c0_i32 = arith.constant 0 : i32
    %c0_i32_0 = arith.constant 0 : i32
    %c0_i32_1 = arith.constant 0 : i32
    return %c0_i32, %c0_i32_0 : i32, i32
  }
  func.func @transform_5(%arg0: i32) -> (i32, i32) {
    %c0_i32 = arith.constant 0 : i32
    %c0_i32_0 = arith.constant 0 : i32
    %c0_i32_1 = arith.constant 0 : i32
    return %c0_i32, %c0_i32_0 : i32, i32
  }
  func.func @transform_6(%arg0: i32) -> (i32, i32) {
    %c0_i32 = arith.constant 0 : i32
    %c0_i32_0 = arith.constant 0 : i32
    %c0_i32_1 = arith.constant 0 : i32
    return %c0_i32, %c0_i32_0 : i32, i32
  }
  func.func @transform_7(%arg0: i32) -> (i32, i32, i32) {
    %c0_i32 = arith.constant 0 : i32
    %c0_i32_0 = arith.constant 0 : i32
    %c0_i32_1 = arith.constant 0 : i32
    return %arg0, %c0_i32, %c0_i32_0 : i32, i32, i32
  }
}

</mosaic_0001>

<llo_original>
// kernel: eegnet_forward.1
$region0: #{eegnet_forward.1}
  #allocation0 [shape = 'u32[]', space=smem, size = 0x4, offset = 0x4, fixed_abs, tag = 'smem constant byte address 0x4 - core index']
  #allocation1 [shape = 'u32[72,128]{1,0:T(1,128)}', space=vmem, size = 0x9000, scoped, tag = 'internal scratch']
  %s0 = inlined_call_operand.vmem [shape: f32[2,16,64], index: 0, kind: input, shape index: {}]
  %s1 = inlined_call_operand.vmem [shape: f32[96,512], index: 1, kind: input, shape index: {}]
  %s2 = inlined_call_operand.vmem [shape: f32[128,256], index: 2, kind: input, shape index: {}]
  %s3 = inlined_call_operand.vmem [shape: f32[560,64], index: 3, kind: input, shape index: {}]
  %s4 = inlined_call_operand.vmem [shape: f32[352,16], index: 4, kind: input, shape index: {}]
  %s5 = inlined_call_operand.vmem [shape: f32[34,32], index: 5, kind: input, shape index: {}]
  %s6 = inlined_call_operand.vmem [shape: f32[97,8], index: 6, kind: input, shape index: {}]
  %s7 = inlined_call_operand.hbm [shape: f32[2,2,4], index: 7, kind: output, shape index: {}]
  %s8 = sld [smem:[#allocation0]]
  $region61: #{eegnet_forward.1} parent=0
    _
  %s10 = ssub.s32 1, %s8
  %s11 = scalar_select 0, %s10, %s8
  $region1: #{eegnet_forward.1} parent=0
    #allocation2 [shape = 'u8[2048]{0}', space=vmem, size = 0x800, scoped, tag = 'output window, operand 0']
    #allocation3 [shape = 's32[2]{0}', space=sflag, size = 0x8, scoped, tag = 'scoped memory for eegnet_forward.1']
    %12 = vsyncpa [#allocation3], 0
    %s13 = scalar_lea.sflag [#allocation3], 1
    %14 = vsyncpa %s13, 0
    loop: start=0, step=1, limit=4
    $region2: #{eegnet_forward.1} parent=1 // loop_pre_header
      _
    $region3: #{eegnet_forward.1} parent=1 // loop_header
      %s16 = sphi 0, %s20
      %p17 = scmp.ge.s32.totalorder %s16, 4
      %s26 = sphi 0, %s28
      %s29 = sphi 0, %s26
      %s30 = sphi 0, %s29
      %s46 = sphi 0, %s30
      %s50 = sphi 0, %s50
      %s52 = sphi 0, %s50
      %s53 = sphi 0, %s52
      %s67 = sphi 0, %s53
      %s71 = sphi 0, %s71
      %s73 = sphi 0, %s71
      %s74 = sphi 0, %s73
      %s88 = sphi 0, %s74
      %s92 = sphi 0, %s92
      %s94 = sphi 0, %s92
      %s95 = sphi 0, %s94
      %s109 = sphi 0, %s95
      %s113 = sphi 0, %s113
      %s115 = sphi 0, %s113
      %s116 = sphi 0, %s115
      %s130 = sphi 0, %s116
      %s134 = sphi 0, %s134
      %s136 = sphi 0, %s134
      %s137 = sphi 0, %s136
      %s151 = sphi 0, %s137
      %s155 = sphi 0, %s155
      %s157 = sphi 0, %s155
      %s158 = sphi 0, %s157
      %s172 = sphi 0, %s158
      %s178 = sphi 0, %s180
      %s181 = sphi 0, %s178
      %s182 = sphi 0, %s181
      %s198 = sphi 0, %s182
    $region4: #{eegnet_forward.1} parent=1 // loop_header_branch
      %19 = sbr.rel (%p17) target = $region8
    $region5: #{eegnet_forward.1} parent=1 // loop_body
      %s21 = ssub.s32 %s16, 1
      %s22 = ssub.s32 %s16, 2
      %s23 = sadd.s32 %s16, 1
      %s24 = ssub.s32 %s16, %s23
      %p25 = scmp.eq.s32.totalorder %s24, 0
      %s27 = sadd.s32 %s26, 1
      %s28 = scalar_select %p25, %s26, %s27
      %p31 = pneg %p25
      %p32 = scmp.eq.s32.totalorder %s16, 1
      %p33 = por %p31, %p32
      %p34 = scmp.ne.s32.totalorder %s26, %s29
      %p35 = scmp.eq.s32.totalorder %s16, 0
      %p36 = por %p34, %p35
      %p37 = scmp.ne.s32.totalorder %s26, %s29
      %p38 = scmp.eq.s32.totalorder %s21, 1
      %p39 = por %p37, %p38
      %p40 = scmp.ne.s32.totalorder %s29, %s30
      %p41 = scmp.eq.s32.totalorder %s21, 0
      %p42 = por %p40, %p41
      %p43 = scmp.ne.s32.totalorder %s29, %s30
      %p44 = scmp.eq.s32.totalorder %s22, 1
      %p45 = por %p43, %p44
      %p47 = scmp.ne.s32.totalorder %s30, %s46
      %p48 = scmp.eq.s32.totalorder %s22, 0
      %p49 = por %p47, %p48
      %s51 = sadd.s32 %s50, 1
      %p54 = scmp.eq.s32.totalorder %s16, 1
      %p55 = scmp.ne.s32.totalorder %s50, %s52
      %p56 = scmp.eq.s32.totalorder %s16, 0
      %p57 = por %p55, %p56
      %p58 = scmp.ne.s32.totalorder %s50, %s52
      %p59 = scmp.eq.s32.totalorder %s21, 1
      %p60 = por %p58, %p59
      %p61 = scmp.ne.s32.totalorder %s52, %s53
      %p62 = scmp.eq.s32.totalorder %s21, 0
      %p63 = por %p61, %p62
      %p64 = scmp.ne.s32.totalorder %s52, %s53
      %p65 = scmp.eq.s32.totalorder %s22, 1
      %p66 = por %p64, %p65
      %p68 = scmp.ne.s32.totalorder %s53, %s67
      %p69 = scmp.eq.s32.totalorder %s22, 0
      %p70 = por %p68, %p69
      %s72 = sadd.s32 %s71, 1
      %p75 = scmp.eq.s32.totalorder %s16, 1
      %p76 = scmp.ne.s32.totalorder %s71, %s73
      %p77 = scmp.eq.s32.totalorder %s16, 0
      %p78 = por %p76, %p77
      %p79 = scmp.ne.s32.totalorder %s71, %s73
      %p80 = scmp.eq.s32.totalorder %s21, 1
      %p81 = por %p79, %p80
      %p82 = scmp.ne.s32.totalorder %s73, %s74
      %p83 = scmp.eq.s32.totalorder %s21, 0
      %p84 = por %p82, %p83
      %p85 = scmp.ne.s32.totalorder %s73, %s74
      %p86 = scmp.eq.s32.totalorder %s22, 1
      %p87 = por %p85, %p86
      %p89 = scmp.ne.s32.totalorder %s74, %s88
      %p90 = scmp.eq.s32.totalorder %s22, 0
      %p91 = por %p89, %p90
      %s93 = sadd.s32 %s92, 1
      %p96 = scmp.eq.s32.totalorder %s16, 1
      %p97 = scmp.ne.s32.totalorder %s92, %s94
      %p98 = scmp.eq.s32.totalorder %s16, 0
      %p99 = por %p97, %p98
      %p100 = scmp.ne.s32.totalorder %s92, %s94
      %p101 = scmp.eq.s32.totalorder %s21, 1
      %p102 = por %p100, %p101
      %p103 = scmp.ne.s32.totalorder %s94, %s95
      %p104 = scmp.eq.s32.totalorder %s21, 0
      %p105 = por %p103, %p104
      %p106 = scmp.ne.s32.totalorder %s94, %s95
      %p107 = scmp.eq.s32.totalorder %s22, 1
      %p108 = por %p106, %p107
      %p110 = scmp.ne.s32.totalorder %s95, %s109
      %p111 = scmp.eq.s32.totalorder %s22, 0
      %p112 = por %p110, %p111
      %s114 = sadd.s32 %s113, 1
      %p117 = scmp.eq.s32.totalorder %s16, 1
      %p118 = scmp.ne.s32.totalorder %s113, %s115
      %p119 = scmp.eq.s32.totalorder %s16, 0
      %p120 = por %p118, %p119
      %p121 = scmp.ne.s32.totalorder %s113, %s115
      %p122 = scmp.eq.s32.totalorder %s21, 1
      %p123 = por %p121, %p122
      %p124 = scmp.ne.s32.totalorder %s115, %s116
      %p125 = scmp.eq.s32.totalorder %s21, 0
      %p126 = por %p124, %p125
      %p127 = scmp.ne.s32.totalorder %s115, %s116
      %p128 = scmp.eq.s32.totalorder %s22, 1
      %p129 = por %p127, %p128
      %p131 = scmp.ne.s32.totalorder %s116, %s130
      %p132 = scmp.eq.s32.totalorder %s22, 0
      %p133 = por %p131, %p132
      %s135 = sadd.s32 %s134, 1
      %p138 = scmp.eq.s32.totalorder %s16, 1
      %p139 = scmp.ne.s32.totalorder %s134, %s136
      %p140 = scmp.eq.s32.totalorder %s16, 0
      %p141 = por %p139, %p140
      %p142 = scmp.ne.s32.totalorder %s134, %s136
      %p143 = scmp.eq.s32.totalorder %s21, 1
      %p144 = por %p142, %p143
      %p145 = scmp.ne.s32.totalorder %s136, %s137
      %p146 = scmp.eq.s32.totalorder %s21, 0
      %p147 = por %p145, %p146
      %p148 = scmp.ne.s32.totalorder %s136, %s137
      %p149 = scmp.eq.s32.totalorder %s22, 1
      %p150 = por %p148, %p149
      %p152 = scmp.ne.s32.totalorder %s137, %s151
      %p153 = scmp.eq.s32.totalorder %s22, 0
      %p154 = por %p152, %p153
      %s156 = sadd.s32 %s155, 1
      %p159 = scmp.eq.s32.totalorder %s16, 1
      %p160 = scmp.ne.s32.totalorder %s155, %s157
      %p161 = scmp.eq.s32.totalorder %s16, 0
      %p162 = por %p160, %p161
      %p163 = scmp.ne.s32.totalorder %s155, %s157
      %p164 = scmp.eq.s32.totalorder %s21, 1
      %p165 = por %p163, %p164
      %p166 = scmp.ne.s32.totalorder %s157, %s158
      %p167 = scmp.eq.s32.totalorder %s21, 0
      %p168 = por %p166, %p167
      %p169 = scmp.ne.s32.totalorder %s157, %s158
      %p170 = scmp.eq.s32.totalorder %s22, 1
      %p171 = por %p169, %p170
      %p173 = scmp.ne.s32.totalorder %s158, %s172
      %p174 = scmp.eq.s32.totalorder %s22, 0
      %p175 = por %p173, %p174
      %s176 = ssub.s32 %s16, %s23
      %p177 = scmp.eq.s32.totalorder %s176, 0
      %s179 = sadd.s32 %s178, 1
      %s180 = scalar_select %p177, %s178, %s179
      %p183 = pneg %p177
      %p184 = scmp.eq.s32.totalorder %s16, 1
      %p185 = por %p183, %p184
      %p186 = scmp.ne.s32.totalorder %s178, %s181
      %p187 = scmp.eq.s32.totalorder %s16, 0
      %p188 = por %p186, %p187
      %p189 = scmp.ne.s32.totalorder %s178, %s181
      %p190 = scmp.eq.s32.totalorder %s21, 1
      %p191 = por %p189, %p190
      %p192 = scmp.ne.s32.totalorder %s181, %s182
      %p193 = scmp.eq.s32.totalorder %s21, 0
      %p194 = por %p192, %p193
      %p195 = scmp.ne.s32.totalorder %s181, %s182
      %p196 = scmp.eq.s32.totalorder %s22, 1
      %p197 = por %p195, %p196
      %p199 = scmp.ne.s32.totalorder %s182, %s198
      %p200 = scmp.eq.s32.totalorder %s22, 0
      %p201 = por %p199, %p200
      %p202 = scmp.le.s32.totalorder 1, %s16
      %p203 = scmp.lt.s32.totalorder %s16, 3
      %p204 = pnand %p202, %p203
      %p205 = pneg %p204
      // Predicated region
      $region9: #{eegnet_forward.1} parent=5 // pred_check
        _
      $region10: #{eegnet_forward.1} parent=5 // pred_check_branch
        %207 = sbr.rel (%p204) target = $region12
      $region11: #{eegnet_forward.1} parent=5 // pred_region
        %s208 = ssub.s32 %s16, 1
        // Predicated region
        $region13: #{eegnet_forward.1} parent=11 // pred_check
          %p209 = pneg %p63
        $region14: #{eegnet_forward.1} parent=11 // pred_check_branch
          %211 = sbr.rel (%p209) target = $region16
        $region15: #{eegnet_forward.1} parent=11 // pred_region
          _
        $region16: #{eegnet_forward.1} parent=11 // pred_fallthru
          _
        // Predicated region
        $region17: #{eegnet_forward.1} parent=11 // pred_check
          %p212 = pneg %p84
        $region18: #{eegnet_forward.1} parent=11 // pred_check_branch
          %214 = sbr.rel (%p212) target = $region20
        $region19: #{eegnet_forward.1} parent=11 // pred_region
          _
        $region20: #{eegnet_forward.1} parent=11 // pred_fallthru
          _
        // Predicated region
        $region21: #{eegnet_forward.1} parent=11 // pred_check
          %p215 = pneg %p105
        $region22: #{eegnet_forward.1} parent=11 // pred_check_branch
          %217 = sbr.rel (%p215) target = $region24
        $region23: #{eegnet_forward.1} parent=11 // pred_region
          _
        $region24: #{eegnet_forward.1} parent=11 // pred_fallthru
          _
        // Predicated region
        $region25: #{eegnet_forward.1} parent=11 // pred_check
          %p218 = pneg %p126
        $region26: #{eegnet_forward.1} parent=11 // pred_check_branch
          %220 = sbr.rel (%p218) target = $region28
        $region27: #{eegnet_forward.1} parent=11 // pred_region
          _
        $region28: #{eegnet_forward.1} parent=11 // pred_fallthru
          _
        // Predicated region
        $region29: #{eegnet_forward.1} parent=11 // pred_check
          %p221 = pneg %p147
        $region30: #{eegnet_forward.1} parent=11 // pred_check_branch
          %223 = sbr.rel (%p221) target = $region32
        $region31: #{eegnet_forward.1} parent=11 // pred_region
          _
        $region32: #{eegnet_forward.1} parent=11 // pred_fallthru
          _
        // Predicated region
        $region33: #{eegnet_forward.1} parent=11 // pred_check
          %p224 = pneg %p168
        $region34: #{eegnet_forward.1} parent=11 // pred_check_branch
          %226 = sbr.rel (%p224) target = $region36
        $region35: #{eegnet_forward.1} parent=11 // pred_region
          _
        $region36: #{eegnet_forward.1} parent=11 // pred_fallthru
          _
      $region12: #{eegnet_forward.1} parent=5 // pred_fallthru
        _
      %p227 = scmp.lt.s32.totalorder %s16, 2
      // Predicated region
      $region37: #{eegnet_forward.1} parent=5 // pred_check
        %p228 = pneg %p227
      $region38: #{eegnet_forward.1} parent=5 // pred_check_branch
        %230 = sbr.rel (%p228) target = $region40
      $region39: #{eegnet_forward.1} parent=5 // pred_region
        // Predicated region
        $region41: #{eegnet_forward.1} parent=39 // pred_check
          %p231 = pneg %p36
        $region42: #{eegnet_forward.1} parent=39 // pred_check_branch
          %233 = sbr.rel (%p231) target = $region44
        $region43: #{eegnet_forward.1} parent=39 // pred_region
          %p234 = scmp.lt.s32.totalorder %s16, 1
          %s235 = scalar_select %p234, %s16, 1
          %s236 = smul.addr %s235, 2
          %s237 = smul.addr %s236, 8
          %s238 = scalar_lea.vmem %s0, %s237
        $region44: #{eegnet_forward.1} parent=39 // pred_fallthru
          _
      $region40: #{eegnet_forward.1} parent=5 // pred_fallthru
        _
      %p239 = scmp.le.s32.totalorder 1, %s16
      %p240 = scmp.lt.s32.totalorder %s16, 3
      %p241 = pnand %p239, %p240
      %p242 = pneg %p241
      // Predicated region
      $region45: #{eegnet_forward.1} parent=5 // pred_check
        _
      $region46: #{eegnet_forward.1} parent=5 // pred_check_branch
        %244 = sbr.rel (%p241) target = $region48
      $region47: #{eegnet_forward.1} parent=5 // pred_region
        %s245 = ssub.s32 %s16, 1
        %p246 = scmp.lt.s32.totalorder %s21, 1
        %s247 = scalar_select %p246, %s21, 1
        %s248 = smul.addr %s247, 2
        %s249 = smul.addr %s248, 8
        %s250 = scalar_lea.vmem %s0, %s249
        %p251 = pneg %p42
        %p252 = pneg %p39
        %p253 = pneg %p63
        %p254 = pneg %p60
        %p255 = pneg %p84
        %p256 = pneg %p81
        %p257 = pneg %p105
        %p258 = pneg %p102
        %p259 = pneg %p126
        %p260 = pneg %p123
        %p261 = pneg %p147
        %p262 = pneg %p144
        %p263 = pneg %p168
        %p264 = pneg %p165
        %p265 = pneg %p194
        %p266 = pneg %p191
        %s267 = sand.u32 %s181, 1
        %s268 = scalar_lea.sflag [#allocation3], %s267
        %s269 = sand.u32 %s181, 1
        %s270 = smul.addr %s269, 2
        %s271 = scalar_lea.vmem [#allocation2], %s270
        %p272 = scmp.lt.s32.totalorder %s21, 1
        %s273 = scalar_select %p272, %s21, 1
        %s274 = smul.addr %s273, 2
        %s275 = smul.addr %s274, 8
        %s276 = scalar_lea.vmem %s0, %s275
        %v277 = vld [vmem:[%s1] sm:$0xff]
        %v278 = vld [vmem:[%s1 + $0x8] sm:$0xff]
        %v279 = vld [vmem:[%s1 + $0x10] sm:$0xff]
        %v280 = vld [vmem:[%s1 + $0x18] sm:$0xff]
        %v281 = vld [vmem:[%s1 + $0x20] sm:$0xff]
        %v282 = vld [vmem:[%s1 + $0x28] sm:$0xff]
        %v283 = vld [vmem:[%s1 + $0x30] sm:$0xff]
        %v284 = vld [vmem:[%s1 + $0x38] sm:$0xff]
        %v285 = vld [vmem:[%s1 + $0x40] sm:$0xff]
        %v286 = vld [vmem:[%s1 + $0x48] sm:$0xff]
        %v287 = vld [vmem:[%s1 + $0x50] sm:$0xff]
        %v288 = vld [vmem:[%s1 + $0x58] sm:$0xff]
        %v289 = vld [vmem:[%s1 + $0x60] sm:$0xff]
        %v290 = vld [vmem:[%s1 + $0x68] sm:$0xff]
        %v291 = vld [vmem:[%s1 + $0x70] sm:$0xff]
        %v292 = vld [vmem:[%s1 + $0x78] sm:$0xff]
        %v293 = vld [vmem:[%s1 + $0x80] sm:$0xff]
        %v294 = vld [vmem:[%s1 + $0x88] sm:$0xff]
        %v295 = vld [vmem:[%s1 + $0x90] sm:$0xff]
        %v296 = vld [vmem:[%s1 + $0x98] sm:$0xff]
        %v297 = vld [vmem:[%s1 + $0xa0] sm:$0xff]
        %v298 = vld [vmem:[%s1 + $0xa8] sm:$0xff]
        %v299 = vld [vmem:[%s1 + $0xb0] sm:$0xff]
        %v300 = vld [vmem:[%s1 + $0xb8] sm:$0xff]
        %v301 = vld [vmem:[%s1 + $0xc0] sm:$0xff]
        %v302 = vld [vmem:[%s1 + $0xc8] sm:$0xff]
        %v303 = vld [vmem:[%s1 + $0xd0] sm:$0xff]
        %v304 = vld [vmem:[%s1 + $0xd8] sm:$0xff]
        %v305 = vld [vmem:[%s1 + $0xe0] sm:$0xff]
        %v306 = vld [vmem:[%s1 + $0xe8] sm:$0xff]
        %v307 = vld [vmem:[%s1 + $0xf0] sm:$0xff]
        %v308 = vld [vmem:[%s1 + $0xf8] sm:$0xff]
        %v309 = vld [vmem:[%s1 + $0x100] sm:$0xff]
        %v310 = vld [vmem:[%s1 + $0x108] sm:$0xff]
        %v311 = vld [vmem:[%s1 + $0x110] sm:$0xff]
        %v312 = vld [vmem:[%s1 + $0x118] sm:$0xff]
        %v313 = vld [vmem:[%s1 + $0x120] sm:$0xff]
        %v314 = vld [vmem:[%s1 + $0x128] sm:$0xff]
        %v315 = vld [vmem:[%s1 + $0x130] sm:$0xff]
        %v316 = vld [vmem:[%s1 + $0x138] sm:$0xff]
        %v317 = vld [vmem:[%s1 + $0x140] sm:$0xff]
        %v318 = vld [vmem:[%s1 + $0x148] sm:$0xff]
        %v319 = vld [vmem:[%s1 + $0x150] sm:$0xff]
        %v320 = vld [vmem:[%s1 + $0x158] sm:$0xff]
        %v321 = vld [vmem:[%s1 + $0x160] sm:$0xff]
        %v322 = vld [vmem:[%s1 + $0x168] sm:$0xff]
        %v323 = vld [vmem:[%s1 + $0x170] sm:$0xff]
        %v324 = vld [vmem:[%s1 + $0x178] sm:$0xff]
        %v325 = vld [vmem:[%s2 + $0xc0] sm:$0xff]
        %v326 = vld [vmem:[%s2 + $0xc8] sm:$0xff]
        %v327 = vld [vmem:[%s2 + $0xd0] sm:$0xff]
        %v328 = vld [vmem:[%s2 + $0xd8] sm:$0xff]
        %v329 = vld [vmem:[%s2 + $0xe0] sm:$0xff]
        %v330 = vld [vmem:[%s2 + $0xe8] sm:$0xff]
        %v331 = vld [vmem:[%s2 + $0xf0] sm:$0xff]
        %v332 = vld [vmem:[%s2 + $0xf8] sm:$0xff]
        %v333 = vld [vmem:[%s3] sm:$0xff]
        %v334 = vld [vmem:[%s3 + $0x8] sm:$0xff]
        %v335 = vld [vmem:[%s3 + $0x10] sm:$0xff]
        %v336 = vld [vmem:[%s3 + $0x18] sm:$0xff]
        %v337 = vld [vmem:[%s3 + $0x20] sm:$0xff]
        %v338 = vld [vmem:[%s3 + $0x28] sm:$0xff]
        %v339 = vld [vmem:[%s3 + $0x30] sm:$0xff]
        %v340 = vld [vmem:[%s3 + $0x38] sm:$0xff]
        %v341 = vld [vmem:[%s3 + $0x40] sm:$0xff]
        %v342 = vld [vmem:[%s3 + $0x48] sm:$0xff]
        %v343 = vld [vmem:[%s3 + $0x50] sm:$0xff]
        %v344 = vld [vmem:[%s3 + $0x58] sm:$0xff]
        %v345 = vld [vmem:[%s3 + $0x60] sm:$0xff]
        %v346 = vld [vmem:[%s3 + $0x68] sm:$0xff]
        %v347 = vld [vmem:[%s3 + $0x70] sm:$0xff]
        %v348 = vld [vmem:[%s3 + $0x78] sm:$0xff]
        %v349 = vld [vmem:[%s3 + $0x80] sm:$0xff]
        %v350 = vld [vmem:[%s3 + $0x88] sm:$0xff]
        %v351 = vld [vmem:[%s3 + $0x90] sm:$0xff]
        %v352 = vld [vmem:[%s3 + $0x98] sm:$0xff]
        %v353 = vld [vmem:[%s3 + $0xa0] sm:$0xff]
        %v354 = vld [vmem:[%s3 + $0xa8] sm:$0xff]
        %v355 = vld [vmem:[%s3 + $0xb0] sm:$0xff]
        %v356 = vld [vmem:[%s3 + $0xb8] sm:$0xff]
        %v357 = vld [vmem:[%s3 + $0xc0] sm:$0xff]
        %v358 = vld [vmem:[%s3 + $0xc8] sm:$0xff]
        %v359 = vld [vmem:[%s3 + $0xd0] sm:$0xff]
        %v360 = vld [vmem:[%s3 + $0xd8] sm:$0xff]
        %v361 = vld [vmem:[%s3 + $0xe0] sm:$0xff]
        %v362 = vld [vmem:[%s3 + $0xe8] sm:$0xff]
        %v363 = vld [vmem:[%s3 + $0xf0] sm:$0xff]
        %v364 = vld [vmem:[%s3 + $0xf8] sm:$0xff]
        %v365 = vld [vmem:[%s3 + $0x100] sm:$0xff]
        %v366 = vld [vmem:[%s3 + $0x108] sm:$0xff]
        %v367 = vld [vmem:[%s3 + $0x110] sm:$0xff]
        %v368 = vld [vmem:[%s3 + $0x118] sm:$0xff]
        %v369 = vld [vmem:[%s3 + $0x120] sm:$0xff]
        %v370 = vld [vmem:[%s3 + $0x128] sm:$0xff]
        %v371 = vld [vmem:[%s3 + $0x130] sm:$0xff]
        %v372 = vld [vmem:[%s3 + $0x138] sm:$0xff]
        %v373 = vld [vmem:[%s3 + $0x140] sm:$0xff]
        %v374 = vld [vmem:[%s3 + $0x148] sm:$0xff]
        %v375 = vld [vmem:[%s3 + $0x150] sm:$0xff]
        %v376 = vld [vmem:[%s3 + $0x158] sm:$0xff]
        %v377 = vld [vmem:[%s3 + $0x160] sm:$0xff]
        %v378 = vld [vmem:[%s3 + $0x168] sm:$0xff]
        %v379 = vld [vmem:[%s3 + $0x170] sm:$0xff]
        %v380 = vld [vmem:[%s3 + $0x178] sm:$0xff]
        %v381 = vld [vmem:[%s3 + $0x180] sm:$0xff]
        %v382 = vld [vmem:[%s3 + $0x188] sm:$0xff]
        %v383 = vld [vmem:[%s3 + $0x190] sm:$0xff]
        %v384 = vld [vmem:[%s3 + $0x198] sm:$0xff]
        %v385 = vld [vmem:[%s3 + $0x1a0] sm:$0xff]
        %v386 = vld [vmem:[%s3 + $0x1a8] sm:$0xff]
        %v387 = vld [vmem:[%s3 + $0x1b0] sm:$0xff]
        %v388 = vld [vmem:[%s3 + $0x1b8] sm:$0xff]
        %v389 = vld [vmem:[%s3 + $0x1c0] sm:$0xff]
        %v390 = vld [vmem:[%s3 + $0x1c8] sm:$0xff]
        %v391 = vld [vmem:[%s3 + $0x1d0] sm:$0xff]
        %v392 = vld [vmem:[%s3 + $0x1d8] sm:$0xff]
        %v393 = vld [vmem:[%s3 + $0x1e0] sm:$0xff]
        %v394 = vld [vmem:[%s3 + $0x1e8] sm:$0xff]
        %v395 = vld [vmem:[%s3 + $0x1f0] sm:$0xff]
        %v396 = vld [vmem:[%s3 + $0x1f8] sm:$0xff]
        %v397 = vld [vmem:[%s3 + $0x200] sm:$0xff]
        %v398 = vld [vmem:[%s3 + $0x208] sm:$0xff]
        %v399 = vld [vmem:[%s3 + $0x210] sm:$0xff]
        %v400 = vld [vmem:[%s3 + $0x218] sm:$0xff]
        %v401 = vld [vmem:[%s3 + $0x220] sm:$0xff]
        %v402 = vld [vmem:[%s3 + $0x228] sm:$0xff]
        %v403 = vld [vmem:[%s4] sm:$0xff]
        %v404 = vld [vmem:[%s4 + $0x8] sm:$0xff]
        %v405 = vld [vmem:[%s4 + $0x10] sm:$0xff]
        %v406 = vld [vmem:[%s4 + $0x18] sm:$0xff]
        %v407 = vld [vmem:[%s4 + $0x20] sm:$0xff]
        %v408 = vld [vmem:[%s4 + $0x28] sm:$0xff]
        %v409 = vld [vmem:[%s4 + $0x30] sm:$0xff]
        %v410 = vld [vmem:[%s4 + $0x38] sm:$0xff]
        %v411 = vld [vmem:[%s4 + $0x40] sm:$0xff]
        %v412 = vld [vmem:[%s4 + $0x48] sm:$0xff]
        %v413 = vld [vmem:[%s4 + $0x50] sm:$0xff]
        %v414 = vld [vmem:[%s4 + $0x58] sm:$0xff]
        %v415 = vld [vmem:[%s4 + $0x60] sm:$0xff]
        %v416 = vld [vmem:[%s4 + $0x68] sm:$0xff]
        %v417 = vld [vmem:[%s4 + $0x70] sm:$0xff]
        %v418 = vld [vmem:[%s4 + $0x78] sm:$0xff]
        %v419 = vld [vmem:[%s4 + $0x80] sm:$0xff]
        %v420 = vld [vmem:[%s4 + $0x88] sm:$0xff]
        %v421 = vld [vmem:[%s4 + $0x90] sm:$0xff]
        %v422 = vld [vmem:[%s4 + $0x98] sm:$0xff]
        %v423 = vld [vmem:[%s4 + $0xa0] sm:$0xff]
        %v424 = vld [vmem:[%s4 + $0xa8] sm:$0xff]
        %v425 = vld [vmem:[%s4 + $0xb0] sm:$0xff]
        %v426 = vld [vmem:[%s4 + $0xb8] sm:$0xff]
        %v427 = vld [vmem:[%s4 + $0xc0] sm:$0xff]
        %v428 = vld [vmem:[%s4 + $0xc8] sm:$0xff]
        %v429 = vld [vmem:[%s4 + $0xd0] sm:$0xff]
        %v430 = vld [vmem:[%s4 + $0xd8] sm:$0xff]
        %v431 = vld [vmem:[%s4 + $0xe0] sm:$0xff]
        %v432 = vld [vmem:[%s4 + $0xe8] sm:$0xff]
        %v433 = vld [vmem:[%s4 + $0xf0] sm:$0xff]
        %v434 = vld [vmem:[%s4 + $0xf8] sm:$0xff]
        %v435 = vld [vmem:[%s4 + $0x100] sm:$0xff]
        %v436 = vld [vmem:[%s4 + $0x108] sm:$0xff]
        %v437 = vld [vmem:[%s4 + $0x110] sm:$0xff]
        %v438 = vld [vmem:[%s4 + $0x118] sm:$0xff]
        %v439 = vld [vmem:[%s4 + $0x120] sm:$0xff]
        %v440 = vld [vmem:[%s4 + $0x128] sm:$0xff]
        %v441 = vld [vmem:[%s4 + $0x130] sm:$0xff]
        %v442 = vld [vmem:[%s4 + $0x138] sm:$0xff]
        %v443 = vld [vmem:[%s4 + $0x140] sm:$0xff]
        %v444 = vld [vmem:[%s4 + $0x148] sm:$0xff]
        %v445 = vld [vmem:[%s4 + $0x150] sm:$0xff]
        %v446 = vld [vmem:[%s4 + $0x158] sm:$0xff]
        %v447 = vld [vmem:[%s5] sm:$0xff]
        %v448 = vld [vmem:[%s5 + $0x8] sm:$0xff]
        %v449 = vld [vmem:[%s5 + $0x10] sm:$0xff]
        %v450 = vld [vmem:[%s5 + $0x18] sm:$0xff]
        %v451 = vld [vmem:[%s5 + $0x20] sm:$0x3]
        %v452 = vld [vmem:[%s6] sm:$0xff]
        %v453 = vld [vmem:[%s6 + $0x8] sm:$0xff]
        %v454 = vld [vmem:[%s6 + $0x10] sm:$0xff]
        %v455 = vld [vmem:[%s6 + $0x18] sm:$0xff]
        %v456 = vld [vmem:[%s6 + $0x20] sm:$0xff]
        %v457 = vld [vmem:[%s6 + $0x28] sm:$0xff]
        %v458 = vld [vmem:[%s6 + $0x30] sm:$0xff]
        %v459 = vld [vmem:[%s6 + $0x38] sm:$0xff]
        %v460 = vld [vmem:[%s6 + $0x40] sm:$0xff]
        %v461 = vld [vmem:[%s6 + $0x48] sm:$0xff]
        %v462 = vld [vmem:[%s6 + $0x50] sm:$0xff]
        %v463 = vld [vmem:[%s6 + $0x58] sm:$0xff]
        %v464 = vld [vmem:[%s6 + $0x60] sm:$0x1]
        %v465 = vld [vmem:[%s276] sm:$0xff]
        %v466 = vld [vmem:[%s276 + $0x8] sm:$0xff]
        %vm467 = vcmask 130048
        %v469 = vsel %vm467, %v443, 0
        %v472 = vsel %vm467, %v444, 0
        %v475 = vsel %vm467, %v445, 0
        %v478 = vsel %vm467, %v446, 0
        %480 = vmatpush.msra.mxu0 0.0
        %481 = vmatpush.msra.mxu0 0.0
        %482 = vmatpush.msra.mxu0 0.0
        %483 = vmatpush.msra.mxu0 0.0
        %484 = vmatpush.msra.mxu0 0.0
        %485 = vmatpush.msra.mxu0 0.0
        %486 = vmatpush.msra.mxu0 0.0
        %487 = vmatpush.msra.mxu0 0.0
        %488 = vmatpush.msra.mxu0 0.0
        %489 = vmatpush.msra.mxu0 0.0
        %490 = vmatpush.msra.mxu0 0.0
        %491 = vmatpush.msra.mxu0 0.0
        %492 = vmatpush.msra.mxu0 0.0
        %493 = vmatpush.msra.mxu0 0.0
        %494 = vmatpush.msra.mxu0 %v466
        %495 = vmatpush.msra.mxu0 %v465
        %496 = vmatmul.f32.gmra.mxu0 %v469
        %v497 = vpop.f32.mrf.mxu0
        %v498 = vadd.f32 0.0, %v497
        %499 = vmatmul.f32.gmra.mxu0 %v472
        %v500 = vpop.f32.mrf.mxu0
        %v501 = vadd.f32 0.0, %v500
        %502 = vmatmul.f32.gmra.mxu0 %v475
        %v503 = vpop.f32.mrf.mxu0
        %v504 = vadd.f32 0.0, %v503
        %505 = vmatmul.f32.gmra.mxu0 %v478
        %v506 = vpop.f32.mrf.mxu0
        %v507 = vadd.f32 0.0, %v506
        %508 = vdwg.mxu0
        %vm509 = vcmask 523264
        %v511 = vsel %vm509, %v498, 0
        %v514 = vsel %vm509, %v501, 0
        %v517 = vsel %vm509, %v504, 0
        %v520 = vsel %vm509, %v507, 0
        %522 = vmatpush.msra.mxu0 0.0
        %523 = vmatpush.msra.mxu0 0.0
        %524 = vmatpush.msra.mxu0 0.0
        %525 = vmatpush.msra.mxu0 0.0
        %526 = vmatpush.msra.mxu0 0.0
        %527 = vmatpush.msra.mxu0 0.0
        %528 = vmatpush.msra.mxu0 0.0
        %529 = vmatpush.msra.mxu0 0.0
        %530 = vmatpush.msra.mxu0 %v305
        %531 = vmatpush.msra.mxu0 %v301
        %532 = vmatpush.msra.mxu0 %v297
        %533 = vmatpush.msra.mxu0 %v293
        %534 = vmatpush.msra.mxu0 %v289
        %535 = vmatpush.msra.mxu0 %v285
        %536 = vmatpush.msra.mxu0 %v281
        %537 = vmatpush.msra.mxu0 %v277
        %538 = vmatmul.f32.gmra.mxu0 %v511
        %v539 = vpop.f32.mrf.mxu0
        %v540 = vadd.f32 0.0, %v539
        %541 = vmatmul.f32.gmra.mxu0 %v514
        %v542 = vpop.f32.mrf.mxu0
        %v543 = vadd.f32 0.0, %v542
        %544 = vmatmul.f32.gmra.mxu0 %v517
        %v545 = vpop.f32.mrf.mxu0
        %v546 = vadd.f32 0.0, %v545
        %547 = vmatmul.f32.gmra.mxu0 %v520
        %v548 = vpop.f32.mrf.mxu0
        %v549 = vadd.f32 0.0, %v548
        %550 = vdwg.mxu0
        %551 = vmatpush.msra.mxu0 0.0
        %552 = vmatpush.msra.mxu0 0.0
        %553 = vmatpush.msra.mxu0 0.0
        %554 = vmatpush.msra.mxu0 0.0
        %555 = vmatpush.msra.mxu0 0.0
        %556 = vmatpush.msra.mxu0 0.0
        %557 = vmatpush.msra.mxu0 0.0
        %558 = vmatpush.msra.mxu0 0.0
        %559 = vmatpush.msra.mxu0 %v306
        %560 = vmatpush.msra.mxu0 %v302
        %561 = vmatpush.msra.mxu0 %v298
        %562 = vmatpush.msra.mxu0 %v294
        %563 = vmatpush.msra.mxu0 %v290
        %564 = vmatpush.msra.mxu0 %v286
        %565 = vmatpush.msra.mxu0 %v282
        %566 = vmatpush.msra.mxu0 %v278
        %567 = vmatmul.f32.gmra.mxu0 %v511
        %v568 = vpop.f32.mrf.mxu0
        %v569 = vadd.f32 0.0, %v568
        %570 = vmatmul.f32.gmra.mxu0 %v514
        %v571 = vpop.f32.mrf.mxu0
        %v572 = vadd.f32 0.0, %v571
        %573 = vmatmul.f32.gmra.mxu0 %v517
        %v574 = vpop.f32.mrf.mxu0
        %v575 = vadd.f32 0.0, %v574
        %576 = vmatmul.f32.gmra.mxu0 %v520
        %v577 = vpop.f32.mrf.mxu0
        %v578 = vadd.f32 0.0, %v577
        %579 = vdwg.mxu0
        %580 = vmatpush.msra.mxu0 0.0
        %581 = vmatpush.msra.mxu0 0.0
        %582 = vmatpush.msra.mxu0 0.0
        %583 = vmatpush.msra.mxu0 0.0
        %584 = vmatpush.msra.mxu0 0.0
        %585 = vmatpush.msra.mxu0 0.0
        %586 = vmatpush.msra.mxu0 0.0
        %587 = vmatpush.msra.mxu0 0.0
        %588 = vmatpush.msra.mxu0 %v307
        %589 = vmatpush.msra.mxu0 %v303
        %590 = vmatpush.msra.mxu0 %v299
        %591 = vmatpush.msra.mxu0 %v295
        %592 = vmatpush.msra.mxu0 %v291
        %593 = vmatpush.msra.mxu0 %v287
        %594 = vmatpush.msra.mxu0 %v283
        %595 = vmatpush.msra.mxu0 %v279
        %596 = vmatmul.f32.gmra.mxu0 %v511
        %v597 = vpop.f32.mrf.mxu0
        %v598 = vadd.f32 0.0, %v597
        %599 = vmatmul.f32.gmra.mxu0 %v514
        %v600 = vpop.f32.mrf.mxu0
        %v601 = vadd.f32 0.0, %v600
        %602 = vmatmul.f32.gmra.mxu0 %v517
        %v603 = vpop.f32.mrf.mxu0
        %v604 = vadd.f32 0.0, %v603
        %605 = vmatmul.f32.gmra.mxu0 %v520
        %v606 = vpop.f32.mrf.mxu0
        %v607 = vadd.f32 0.0, %v606
        %608 = vdwg.mxu0
        %609 = vmatpush.msra.mxu0 0.0
        %610 = vmatpush.msra.mxu0 0.0
        %611 = vmatpush.msra.mxu0 0.0
        %612 = vmatpush.msra.mxu0 0.0
        %613 = vmatpush.msra.mxu0 0.0
        %614 = vmatpush.msra.mxu0 0.0
        %615 = vmatpush.msra.mxu0 0.0
        %616 = vmatpush.msra.mxu0 0.0
        %617 = vmatpush.msra.mxu0 %v308
        %618 = vmatpush.msra.mxu0 %v304
        %619 = vmatpush.msra.mxu0 %v300
        %620 = vmatpush.msra.mxu0 %v296
        %621 = vmatpush.msra.mxu0 %v292
        %622 = vmatpush.msra.mxu0 %v288
        %623 = vmatpush.msra.mxu0 %v284
        %624 = vmatpush.msra.mxu0 %v280
        %625 = vmatmul.f32.gmra.mxu0 %v511
        %v626 = vpop.f32.mrf.mxu0
        %v627 = vadd.f32 0.0, %v626
        %628 = vmatmul.f32.gmra.mxu0 %v514
        %v629 = vpop.f32.mrf.mxu0
        %v630 = vadd.f32 0.0, %v629
        %631 = vmatmul.f32.gmra.mxu0 %v517
        %v632 = vpop.f32.mrf.mxu0
        %v633 = vadd.f32 0.0, %v632
        %634 = vmatmul.f32.gmra.mxu0 %v520
        %v635 = vpop.f32.mrf.mxu0
        %v636 = vadd.f32 0.0, %v635
        %637 = vdwg.mxu0
        %v638 = vmul.f32 %v540, %v309
        %v639 = vmul.f32 %v569, %v310
        %v640 = vmul.f32 %v598, %v311
        %v641 = vmul.f32 %v627, %v312
        %v642 = vmul.f32 %v543, %v313
        %v643 = vmul.f32 %v572, %v314
        %v644 = vmul.f32 %v601, %v315
        %v645 = vmul.f32 %v630, %v316
        %v646 = vmul.f32 %v546, %v317
        %v647 = vmul.f32 %v575, %v318
        %v648 = vmul.f32 %v604, %v319
        %v649 = vmul.f32 %v633, %v320
        %v650 = vmul.f32 %v549, %v321
        %v651 = vmul.f32 %v578, %v322
        %v652 = vmul.f32 %v607, %v323
        %v653 = vmul.f32 %v636, %v324
        %655 = vset.pattern.permute.xlu0 0
        %656 = vperm.xlu0 %655, %v460
        %v657 = vpop.permute.xlu0 %656
        %660 = vset.pattern.permute.xlu0 0
        %661 = vperm.xlu0 %660, %v461
        %v662 = vpop.permute.xlu0 %661
        %665 = vset.pattern.permute.xlu0 0
        %666 = vperm.xlu0 %665, %v462
        %v667 = vpop.permute.xlu0 %666
        %670 = vset.pattern.permute.xlu0 0
        %671 = vperm.xlu0 %670, %v463
        %v672 = vpop.permute.xlu0 %671
        %674 = vmatpush.msra.mxu0 %v348
        %675 = vmatpush.msra.mxu0 %v347
        %676 = vmatpush.msra.mxu0 %v346
        %677 = vmatpush.msra.mxu0 %v345
        %678 = vmatpush.msra.mxu0 %v344
        %679 = vmatpush.msra.mxu0 %v343
        %680 = vmatpush.msra.mxu0 %v342
        %681 = vmatpush.msra.mxu0 %v341
        %682 = vmatpush.msra.mxu0 %v340
        %683 = vmatpush.msra.mxu0 %v339
        %684 = vmatpush.msra.mxu0 %v338
        %685 = vmatpush.msra.mxu0 %v337
        %686 = vmatpush.msra.mxu0 %v336
        %687 = vmatpush.msra.mxu0 %v335
        %688 = vmatpush.msra.mxu0 %v334
        %689 = vmatpush.msra.mxu0 %v333
        %690 = vmatmul.f32.gmra.mxu0 %v638
        %v691 = vpop.f32.mrf.mxu0
        %v692 = vadd.f32 %v657, %v691
        %693 = vmatmul.f32.gmra.mxu0 %v642
        %v694 = vpop.f32.mrf.mxu0
        %v695 = vadd.f32 %v662, %v694
        %696 = vmatmul.f32.gmra.mxu0 %v646
        %v697 = vpop.f32.mrf.mxu0
        %v698 = vadd.f32 %v667, %v697
        %699 = vmatmul.f32.gmra.mxu0 %v650
        %v700 = vpop.f32.mrf.mxu0
        %v701 = vadd.f32 %v672, %v700
        %702 = vdwg.mxu0
        %703 = vmatpush.msra.mxu0 %v364
        %704 = vmatpush.msra.mxu0 %v363
        %705 = vmatpush.msra.mxu0 %v362
        %706 = vmatpush.msra.mxu0 %v361
        %707 = vmatpush.msra.mxu0 %v360
        %708 = vmatpush.msra.mxu0 %v359
        %709 = vmatpush.msra.mxu0 %v358
        %710 = vmatpush.msra.mxu0 %v357
        %711 = vmatpush.msra.mxu0 %v356
        %712 = vmatpush.msra.mxu0 %v355
        %713 = vmatpush.msra.mxu0 %v354
        %714 = vmatpush.msra.mxu0 %v353
        %715 = vmatpush.msra.mxu0 %v352
        %716 = vmatpush.msra.mxu0 %v351
        %717 = vmatpush.msra.mxu0 %v350
        %718 = vmatpush.msra.mxu0 %v349
        %719 = vmatmul.f32.gmra.mxu0 %v639
        %v720 = vpop.f32.mrf.mxu0
        %v721 = vadd.f32 %v692, %v720
        %722 = vmatmul.f32.gmra.mxu0 %v643
        %v723 = vpop.f32.mrf.mxu0
        %v724 = vadd.f32 %v695, %v723
        %725 = vmatmul.f32.gmra.mxu0 %v647
        %v726 = vpop.f32.mrf.mxu0
        %v727 = vadd.f32 %v698, %v726
        %728 = vmatmul.f32.gmra.mxu0 %v651
        %v729 = vpop.f32.mrf.mxu0
        %v730 = vadd.f32 %v701, %v729
        %731 = vdwg.mxu0
        %732 = vmatpush.msra.mxu0 %v380
        %733 = vmatpush.msra.mxu0 %v379
        %734 = vmatpush.msra.mxu0 %v378
        %735 = vmatpush.msra.mxu0 %v377
        %736 = vmatpush.msra.mxu0 %v376
        %737 = vmatpush.msra.mxu0 %v375
        %738 = vmatpush.msra.mxu0 %v374
        %739 = vmatpush.msra.mxu0 %v373
        %740 = vmatpush.msra.mxu0 %v372
        %741 = vmatpush.msra.mxu0 %v371
        %742 = vmatpush.msra.mxu0 %v370
        %743 = vmatpush.msra.mxu0 %v369
        %744 = vmatpush.msra.mxu0 %v368
        %745 = vmatpush.msra.mxu0 %v367
        %746 = vmatpush.msra.mxu0 %v366
        %747 = vmatpush.msra.mxu0 %v365
        %748 = vmatmul.f32.gmra.mxu0 %v640
        %v749 = vpop.f32.mrf.mxu0
        %v750 = vadd.f32 %v721, %v749
        %751 = vmatmul.f32.gmra.mxu0 %v644
        %v752 = vpop.f32.mrf.mxu0
        %v753 = vadd.f32 %v724, %v752
        %754 = vmatmul.f32.gmra.mxu0 %v648
        %v755 = vpop.f32.mrf.mxu0
        %v756 = vadd.f32 %v727, %v755
        %757 = vmatmul.f32.gmra.mxu0 %v652
        %v758 = vpop.f32.mrf.mxu0
        %v759 = vadd.f32 %v730, %v758
        %760 = vdwg.mxu0
        %761 = vmatpush.msra.mxu0 %v396
        %762 = vmatpush.msra.mxu0 %v395
        %763 = vmatpush.msra.mxu0 %v394
        %764 = vmatpush.msra.mxu0 %v393
        %765 = vmatpush.msra.mxu0 %v392
        %766 = vmatpush.msra.mxu0 %v391
        %767 = vmatpush.msra.mxu0 %v390
        %768 = vmatpush.msra.mxu0 %v389
        %769 = vmatpush.msra.mxu0 %v388
        %770 = vmatpush.msra.mxu0 %v387
        %771 = vmatpush.msra.mxu0 %v386
        %772 = vmatpush.msra.mxu0 %v385
        %773 = vmatpush.msra.mxu0 %v384
        %774 = vmatpush.msra.mxu0 %v383
        %775 = vmatpush.msra.mxu0 %v382
        %776 = vmatpush.msra.mxu0 %v381
        %777 = vmatmul.f32.gmra.mxu0 %v641
        %v778 = vpop.f32.mrf.mxu0
        %v779 = vadd.f32 %v750, %v778
        %780 = vmatmul.f32.gmra.mxu0 %v645
        %v781 = vpop.f32.mrf.mxu0
        %v782 = vadd.f32 %v753, %v781
        %783 = vmatmul.f32.gmra.mxu0 %v649
        %v784 = vpop.f32.mrf.mxu0
        %v785 = vadd.f32 %v756, %v784
        %786 = vmatmul.f32.gmra.mxu0 %v653
        %v787 = vpop.f32.mrf.mxu0
        %v788 = vadd.f32 %v759, %v787
        %789 = vdwg.mxu0
        %vm790 = vcmp.gt.f32.partialorder %v779, 0.0
        %vm791 = vcmp.gt.f32.partialorder %v782, 0.0
        %vm792 = vcmp.gt.f32.partialorder %v785, 0.0
        %vm793 = vcmp.gt.f32.partialorder %v788, 0.0
        %v794 = vmin.f32 %v779, 0.0
        %v795 = vmin.f32 %v782, 0.0
        %v796 = vmin.f32 %v785, 0.0
        %v797 = vmin.f32 %v788, 0.0
        %v798 = vmul.f32 %v794, 1.442695
        %v799 = vpow.pop %v798
        %v800 = vmul.f32 %v795, 1.442695
        %v801 = vpow.pop %v800
        %v802 = vmul.f32 %v796, 1.442695
        %v803 = vpow.pop %v802
        %v804 = vmul.f32 %v797, 1.442695
        %v805 = vpow.pop %v804
        %v806 = vsub.f32 %v799, 1.0
        %v807 = vsub.f32 %v801, 1.0
        %v808 = vsub.f32 %v803, 1.0
        %v809 = vsub.f32 %v805, 1.0
        %v810 = vsel %vm790, %v779, %v806
        %v811 = vsel %vm791, %v782, %v807
        %v812 = vsel %vm792, %v785, %v808
        %v813 = vsel %vm793, %v788, %v809
        %v815 = vsel %vm509, %v810, 0
        %v818 = vsel %vm509, %v811, 0
        %v821 = vsel %vm509, %v812, 0
        %v824 = vsel %vm509, %v813, 0
        %826 = vmatpush.msra.mxu0 0.0
        %827 = vmatpush.msra.mxu0 0.0
        %828 = vmatpush.msra.mxu0 0.0
        %829 = vmatpush.msra.mxu0 0.0
        %830 = vmatpush.msra.mxu0 0.0
        %831 = vmatpush.msra.mxu0 0.0
        %832 = vmatpush.msra.mxu0 0.0
        %833 = vmatpush.msra.mxu0 0.0
        %834 = vmatpush.msra.mxu0 %v410
        %835 = vmatpush.msra.mxu0 %v409
        %836 = vmatpush.msra.mxu0 %v408
        %837 = vmatpush.msra.mxu0 %v407
        %838 = vmatpush.msra.mxu0 %v406
        %839 = vmatpush.msra.mxu0 %v405
        %840 = vmatpush.msra.mxu0 %v404
        %841 = vmatpush.msra.mxu0 %v403
        %842 = vmatmul.f32.gmra.mxu0 %v815
        %v843 = vpop.f32.mrf.mxu0
        %v844 = vadd.f32 0.0, %v843
        %845 = vmatmul.f32.gmra.mxu0 %v818
        %v846 = vpop.f32.mrf.mxu0
        %v847 = vadd.f32 0.0, %v846
        %848 = vmatmul.f32.gmra.mxu0 %v821
        %v849 = vpop.f32.mrf.mxu0
        %v850 = vadd.f32 0.0, %v849
        %851 = vmatmul.f32.gmra.mxu0 %v824
        %v852 = vpop.f32.mrf.mxu0
        %v853 = vadd.f32 0.0, %v852
        %854 = vdwg.mxu0
        %v855 = vld [vmem:[%s2] sm:$0xff]
        %v856 = vld [vmem:[%s2 + $0x8] sm:$0xff]
        %v857 = vld [vmem:[%s2 + $0x10] sm:$0xff]
        %v858 = vld [vmem:[%s2 + $0x18] sm:$0xff]
        %v860 = vsel %vm467, %v844, 0
        %v863 = vsel %vm467, %v847, 0
        %v866 = vsel %vm467, %v850, 0
        %v869 = vsel %vm467, %v853, 0
        %871 = vmatpush.msra.mxu0 0.0
        %872 = vmatpush.msra.mxu0 0.0
        %873 = vmatpush.msra.mxu0 0.0
        %874 = vmatpush.msra.mxu0 0.0
        %875 = vmatpush.msra.mxu0 0.0
        %876 = vmatpush.msra.mxu0 0.0
        %877 = vmatpush.msra.mxu0 0.0
        %878 = vmatpush.msra.mxu0 0.0
        %879 = vmatpush.msra.mxu0 0.0
        %880 = vmatpush.msra.mxu0 0.0
        %881 = vmatpush.msra.mxu0 0.0
        %882 = vmatpush.msra.mxu0 0.0
        %883 = vmatpush.msra.mxu0 0.0
        %884 = vmatpush.msra.mxu0 0.0
        %885 = vmatpush.msra.mxu0 %v857
        %886 = vmatpush.msra.mxu0 %v855
        %887 = vmatmul.f32.gmra.mxu0 %v860
        %v888 = vpop.f32.mrf.mxu0
        %v889 = vadd.f32 0.0, %v888
        %890 = vmatmul.f32.gmra.mxu0 %v863
        %v891 = vpop.f32.mrf.mxu0
        %v892 = vadd.f32 0.0, %v891
        %893 = vmatmul.f32.gmra.mxu0 %v866
        %v894 = vpop.f32.mrf.mxu0
        %v895 = vadd.f32 0.0, %v894
        %896 = vmatmul.f32.gmra.mxu0 %v869
        %v897 = vpop.f32.mrf.mxu0
        %v898 = vadd.f32 0.0, %v897
        %899 = vdwg.mxu0
        %900 = vmatpush.msra.mxu0 0.0
        %901 = vmatpush.msra.mxu0 0.0
        %902 = vmatpush.msra.mxu0 0.0
        %903 = vmatpush.msra.mxu0 0.0
        %904 = vmatpush.msra.mxu0 0.0
        %905 = vmatpush.msra.mxu0 0.0
        %906 = vmatpush.msra.mxu0 0.0
        %907 = vmatpush.msra.mxu0 0.0
        %908 = vmatpush.msra.mxu0 0.0
        %909 = vmatpush.msra.mxu0 0.0
        %910 = vmatpush.msra.mxu0 0.0
        %911 = vmatpush.msra.mxu0 0.0
        %912 = vmatpush.msra.mxu0 0.0
        %913 = vmatpush.msra.mxu0 0.0
        %914 = vmatpush.msra.mxu0 %v858
        %915 = vmatpush.msra.mxu0 %v856
        %916 = vmatmul.f32.gmra.mxu0 %v860
        %v917 = vpop.f32.mrf.mxu0
        %v918 = vadd.f32 0.0, %v917
        %919 = vmatmul.f32.gmra.mxu0 %v863
        %v920 = vpop.f32.mrf.mxu0
        %v921 = vadd.f32 0.0, %v920
        %922 = vmatmul.f32.gmra.mxu0 %v866
        %v923 = vpop.f32.mrf.mxu0
        %v924 = vadd.f32 0.0, %v923
        %925 = vmatmul.f32.gmra.mxu0 %v869
        %v926 = vpop.f32.mrf.mxu0
        %v927 = vadd.f32 0.0, %v926
        %928 = vdwg.mxu0
        %v929 = vmul.f32 %v889, %v325
        %v930 = vmul.f32 %v918, %v326
        %v931 = vmul.f32 %v892, %v327
        %v932 = vmul.f32 %v921, %v328
        %v933 = vmul.f32 %v895, %v329
        %v934 = vmul.f32 %v924, %v330
        %v935 = vmul.f32 %v898, %v331
        %v936 = vmul.f32 %v927, %v332
        %937 = vmatpush.msra.mxu0 %v426
        %938 = vmatpush.msra.mxu0 %v425
        %939 = vmatpush.msra.mxu0 %v424
        %940 = vmatpush.msra.mxu0 %v423
        %941 = vmatpush.msra.mxu0 %v422
        %942 = vmatpush.msra.mxu0 %v421
        %943 = vmatpush.msra.mxu0 %v420
        %944 = vmatpush.msra.mxu0 %v419
        %945 = vmatpush.msra.mxu0 %v418
        %946 = vmatpush.msra.mxu0 %v417
        %947 = vmatpush.msra.mxu0 %v416
        %948 = vmatpush.msra.mxu0 %v415
        %949 = vmatpush.msra.mxu0 %v414
        %950 = vmatpush.msra.mxu0 %v413
        %951 = vmatpush.msra.mxu0 %v412
        %952 = vmatpush.msra.mxu0 %v411
        %953 = vmatmul.f32.gmra.mxu0 %v929
        %v954 = vpop.f32.mrf.mxu0
        %v955 = vadd.f32 0.0, %v954
        %956 = vmatmul.f32.gmra.mxu0 %v931
        %v957 = vpop.f32.mrf.mxu0
        %v958 = vadd.f32 0.0, %v957
        %959 = vmatmul.f32.gmra.mxu0 %v933
        %v960 = vpop.f32.mrf.mxu0
        %v961 = vadd.f32 0.0, %v960
        %962 = vmatmul.f32.gmra.mxu0 %v935
        %v963 = vpop.f32.mrf.mxu0
        %v964 = vadd.f32 0.0, %v963
        %965 = vdwg.mxu0
        %966 = vmatpush.msra.mxu0 %v442
        %967 = vmatpush.msra.mxu0 %v441
        %968 = vmatpush.msra.mxu0 %v440
        %969 = vmatpush.msra.mxu0 %v439
        %970 = vmatpush.msra.mxu0 %v438
        %971 = vmatpush.msra.mxu0 %v437
        %972 = vmatpush.msra.mxu0 %v436
        %973 = vmatpush.msra.mxu0 %v435
        %974 = vmatpush.msra.mxu0 %v434
        %975 = vmatpush.msra.mxu0 %v433
        %976 = vmatpush.msra.mxu0 %v432
        %977 = vmatpush.msra.mxu0 %v431
        %978 = vmatpush.msra.mxu0 %v430
        %979 = vmatpush.msra.mxu0 %v429
        %980 = vmatpush.msra.mxu0 %v428
        %981 = vmatpush.msra.mxu0 %v427
        %982 = vmatmul.f32.gmra.mxu0 %v930
        %v983 = vpop.f32.mrf.mxu0
        %v984 = vadd.f32 %v955, %v983
        %985 = vmatmul.f32.gmra.mxu0 %v932
        %v986 = vpop.f32.mrf.mxu0
        %v987 = vadd.f32 %v958, %v986
        %988 = vmatmul.f32.gmra.mxu0 %v934
        %v989 = vpop.f32.mrf.mxu0
        %v990 = vadd.f32 %v961, %v989
        %991 = vmatmul.f32.gmra.mxu0 %v936
        %v992 = vpop.f32.mrf.mxu0
        %v993 = vadd.f32 %v964, %v992
        %994 = vdwg.mxu0
        %v995 = vld [vmem:[%s2 + $0x20] sm:$0xff]
        %v996 = vld [vmem:[%s2 + $0x28] sm:$0xff]
        %v997 = vld [vmem:[%s2 + $0x30] sm:$0xff]
        %v998 = vld [vmem:[%s2 + $0x38] sm:$0xff]
        %v1000 = vsel %vm467, %v984, 0
        %v1003 = vsel %vm467, %v987, 0
        %v1006 = vsel %vm467, %v990, 0
        %v1009 = vsel %vm467, %v993, 0
        %1011 = vmatpush.msra.mxu0 0.0
        %1012 = vmatpush.msra.mxu0 0.0
        %1013 = vmatpush.msra.mxu0 0.0
        %1014 = vmatpush.msra.mxu0 0.0
        %1015 = vmatpush.msra.mxu0 0.0
        %1016 = vmatpush.msra.mxu0 0.0
        %1017 = vmatpush.msra.mxu0 0.0
        %1018 = vmatpush.msra.mxu0 0.0
        %1019 = vmatpush.msra.mxu0 0.0
        %1020 = vmatpush.msra.mxu0 0.0
        %1021 = vmatpush.msra.mxu0 0.0
        %1022 = vmatpush.msra.mxu0 0.0
        %1023 = vmatpush.msra.mxu0 0.0
        %1024 = vmatpush.msra.mxu0 0.0
        %1025 = vmatpush.msra.mxu0 %v997
        %1026 = vmatpush.msra.mxu0 %v995
        %1027 = vmatmul.f32.gmra.mxu0 %v1000
        %v1028 = vpop.f32.mrf.mxu0
        %v1029 = vadd.f32 0.0, %v1028
        %1030 = vmatmul.f32.gmra.mxu0 %v1003
        %v1031 = vpop.f32.mrf.mxu0
        %v1032 = vadd.f32 0.0, %v1031
        %1033 = vmatmul.f32.gmra.mxu0 %v1006
        %v1034 = vpop.f32.mrf.mxu0
        %v1035 = vadd.f32 0.0, %v1034
        %1036 = vmatmul.f32.gmra.mxu0 %v1009
        %v1037 = vpop.f32.mrf.mxu0
        %v1038 = vadd.f32 0.0, %v1037
        %1039 = vdwg.mxu0
        %1040 = vmatpush.msra.mxu0 0.0
        %1041 = vmatpush.msra.mxu0 0.0
        %1042 = vmatpush.msra.mxu0 0.0
        %1043 = vmatpush.msra.mxu0 0.0
        %1044 = vmatpush.msra.mxu0 0.0
        %1045 = vmatpush.msra.mxu0 0.0
        %1046 = vmatpush.msra.mxu0 0.0
        %1047 = vmatpush.msra.mxu0 0.0
        %1048 = vmatpush.msra.mxu0 0.0
        %1049 = vmatpush.msra.mxu0 0.0
        %1050 = vmatpush.msra.mxu0 0.0
        %1051 = vmatpush.msra.mxu0 0.0
        %1052 = vmatpush.msra.mxu0 0.0
        %1053 = vmatpush.msra.mxu0 0.0
        %1054 = vmatpush.msra.mxu0 %v998
        %1055 = vmatpush.msra.mxu0 %v996
        %1056 = vmatmul.f32.gmra.mxu0 %v1000
        %v1057 = vpop.f32.mrf.mxu0
        %v1058 = vadd.f32 0.0, %v1057
        %1059 = vmatmul.f32.gmra.mxu0 %v1003
        %v1060 = vpop.f32.mrf.mxu0
        %v1061 = vadd.f32 0.0, %v1060
        %1062 = vmatmul.f32.gmra.mxu0 %v1006
        %v1063 = vpop.f32.mrf.mxu0
        %v1064 = vadd.f32 0.0, %v1063
        %1065 = vmatmul.f32.gmra.mxu0 %v1009
        %v1066 = vpop.f32.mrf.mxu0
        %v1067 = vadd.f32 0.0, %v1066
        %1068 = vdwg.mxu0
        %v1069 = vmul.f32 %v1029, %v325
        %v1070 = vmul.f32 %v1058, %v326
        %v1071 = vmul.f32 %v1032, %v327
        %v1072 = vmul.f32 %v1061, %v328
        %v1073 = vmul.f32 %v1035, %v329
        %v1074 = vmul.f32 %v1064, %v330
        %v1075 = vmul.f32 %v1038, %v331
        %v1076 = vmul.f32 %v1067, %v332
        %1077 = vset.pattern.permute.xlu0 2
        %1078 = vperm.xlu0 %1077, %v460
        %v1079 = vpop.permute.xlu0 %1078
        %1081 = vset.pattern.permute.xlu0 2
        %1082 = vperm.xlu0 %1081, %v461
        %v1083 = vpop.permute.xlu0 %1082
        %1085 = vset.pattern.permute.xlu0 2
        %1086 = vperm.xlu0 %1085, %v462
        %v1087 = vpop.permute.xlu0 %1086
        %1089 = vset.pattern.permute.xlu0 2
        %1090 = vperm.xlu0 %1089, %v463
        %v1091 = vpop.permute.xlu0 %1090
        %1093 = vmatpush.msra.mxu0 %v426
        %1094 = vmatpush.msra.mxu0 %v425
        %1095 = vmatpush.msra.mxu0 %v424
        %1096 = vmatpush.msra.mxu0 %v423
        %1097 = vmatpush.msra.mxu0 %v422
        %1098 = vmatpush.msra.mxu0 %v421
        %1099 = vmatpush.msra.mxu0 %v420
        %1100 = vmatpush.msra.mxu0 %v419
        %1101 = vmatpush.msra.mxu0 %v418
        %1102 = vmatpush.msra.mxu0 %v417
        %1103 = vmatpush.msra.mxu0 %v416
        %1104 = vmatpush.msra.mxu0 %v415
        %1105 = vmatpush.msra.mxu0 %v414
        %1106 = vmatpush.msra.mxu0 %v413
        %1107 = vmatpush.msra.mxu0 %v412
        %1108 = vmatpush.msra.mxu0 %v411
        %1109 = vmatmul.f32.gmra.mxu0 %v1069
        %v1110 = vpop.f32.mrf.mxu0
        %v1111 = vadd.f32 %v1079, %v1110
        %1112 = vmatmul.f32.gmra.mxu0 %v1071
        %v1113 = vpop.f32.mrf.mxu0
        %v1114 = vadd.f32 %v1083, %v1113
        %1115 = vmatmul.f32.gmra.mxu0 %v1073
        %v1116 = vpop.f32.mrf.mxu0
        %v1117 = vadd.f32 %v1087, %v1116
        %1118 = vmatmul.f32.gmra.mxu0 %v1075
        %v1119 = vpop.f32.mrf.mxu0
        %v1120 = vadd.f32 %v1091, %v1119
        %1121 = vdwg.mxu0
        %1122 = vmatpush.msra.mxu0 %v442
        %1123 = vmatpush.msra.mxu0 %v441
        %1124 = vmatpush.msra.mxu0 %v440
        %1125 = vmatpush.msra.mxu0 %v439
        %1126 = vmatpush.msra.mxu0 %v438
        %1127 = vmatpush.msra.mxu0 %v437
        %1128 = vmatpush.msra.mxu0 %v436
        %1129 = vmatpush.msra.mxu0 %v435
        %1130 = vmatpush.msra.mxu0 %v434
        %1131 = vmatpush.msra.mxu0 %v433
        %1132 = vmatpush.msra.mxu0 %v432
        %1133 = vmatpush.msra.mxu0 %v431
        %1134 = vmatpush.msra.mxu0 %v430
        %1135 = vmatpush.msra.mxu0 %v429
        %1136 = vmatpush.msra.mxu0 %v428
        %1137 = vmatpush.msra.mxu0 %v427
        %1138 = vmatmul.f32.gmra.mxu0 %v1070
        %v1139 = vpop.f32.mrf.mxu0
        %v1140 = vadd.f32 %v1111, %v1139
        %1141 = vmatmul.f32.gmra.mxu0 %v1072
        %v1142 = vpop.f32.mrf.mxu0
        %v1143 = vadd.f32 %v1114, %v1142
        %1144 = vmatmul.f32.gmra.mxu0 %v1074
        %v1145 = vpop.f32.mrf.mxu0
        %v1146 = vadd.f32 %v1117, %v1145
        %1147 = vmatmul.f32.gmra.mxu0 %v1076
        %v1148 = vpop.f32.mrf.mxu0
        %v1149 = vadd.f32 %v1120, %v1148
        %1150 = vdwg.mxu0
        %vm1151 = vcmp.gt.f32.partialorder %v1140, 0.0
        %vm1152 = vcmp.gt.f32.partialorder %v1143, 0.0
        %vm1153 = vcmp.gt.f32.partialorder %v1146, 0.0
        %vm1154 = vcmp.gt.f32.partialorder %v1149, 0.0
        %v1155 = vmin.f32 %v1140, 0.0
        %v1156 = vmin.f32 %v1143, 0.0
        %v1157 = vmin.f32 %v1146, 0.0
        %v1158 = vmin.f32 %v1149, 0.0
        %v1159 = vmul.f32 %v1155, 1.442695
        %v1160 = vpow.pop %v1159
        %v1161 = vmul.f32 %v1156, 1.442695
        %v1162 = vpow.pop %v1161
        %v1163 = vmul.f32 %v1157, 1.442695
        %v1164 = vpow.pop %v1163
        %v1165 = vmul.f32 %v1158, 1.442695
        %v1166 = vpow.pop %v1165
        %v1167 = vsub.f32 %v1160, 1.0
        %v1168 = vsub.f32 %v1162, 1.0
        %v1169 = vsub.f32 %v1164, 1.0
        %v1170 = vsub.f32 %v1166, 1.0
        %v1171 = vsel %vm1151, %v1140, %v1167
        %v1172 = vsel %vm1152, %v1143, %v1168
        %v1173 = vsel %vm1153, %v1146, %v1169
        %v1174 = vsel %vm1154, %v1149, %v1170
        %v1175 = vadd.f32 %v1171, %v984
        %v1176 = vadd.f32 %v1172, %v987
        %v1177 = vadd.f32 %v1173, %v990
        %v1178 = vadd.f32 %v1174, %v993
        %v1179 = vld [vmem:[%s2 + $0x40] sm:$0xff]
        %v1180 = vld [vmem:[%s2 + $0x48] sm:$0xff]
        %v1181 = vld [vmem:[%s2 + $0x50] sm:$0xff]
        %v1182 = vld [vmem:[%s2 + $0x58] sm:$0xff]
        %v1184 = vsel %vm467, %v1175, 0
        %v1187 = vsel %vm467, %v1176, 0
        %v1190 = vsel %vm467, %v1177, 0
        %v1193 = vsel %vm467, %v1178, 0
        %1195 = vmatpush.msra.mxu0 0.0
        %1196 = vmatpush.msra.mxu0 0.0
        %1197 = vmatpush.msra.mxu0 0.0
        %1198 = vmatpush.msra.mxu0 0.0
        %1199 = vmatpush.msra.mxu0 0.0
        %1200 = vmatpush.msra.mxu0 0.0
        %1201 = vmatpush.msra.mxu0 0.0
        %1202 = vmatpush.msra.mxu0 0.0
        %1203 = vmatpush.msra.mxu0 0.0
        %1204 = vmatpush.msra.mxu0 0.0
        %1205 = vmatpush.msra.mxu0 0.0
        %1206 = vmatpush.msra.mxu0 0.0
        %1207 = vmatpush.msra.mxu0 0.0
        %1208 = vmatpush.msra.mxu0 0.0
        %1209 = vmatpush.msra.mxu0 %v1181
        %1210 = vmatpush.msra.mxu0 %v1179
        %1211 = vmatmul.f32.gmra.mxu0 %v1184
        %v1212 = vpop.f32.mrf.mxu0
        %v1213 = vadd.f32 0.0, %v1212
        %1214 = vmatmul.f32.gmra.mxu0 %v1187
        %v1215 = vpop.f32.mrf.mxu0
        %v1216 = vadd.f32 0.0, %v1215
        %1217 = vmatmul.f32.gmra.mxu0 %v1190
        %v1218 = vpop.f32.mrf.mxu0
        %v1219 = vadd.f32 0.0, %v1218
        %1220 = vmatmul.f32.gmra.mxu0 %v1193
        %v1221 = vpop.f32.mrf.mxu0
        %v1222 = vadd.f32 0.0, %v1221
        %1223 = vdwg.mxu0
        %1224 = vmatpush.msra.mxu0 0.0
        %1225 = vmatpush.msra.mxu0 0.0
        %1226 = vmatpush.msra.mxu0 0.0
        %1227 = vmatpush.msra.mxu0 0.0
        %1228 = vmatpush.msra.mxu0 0.0
        %1229 = vmatpush.msra.mxu0 0.0
        %1230 = vmatpush.msra.mxu0 0.0
        %1231 = vmatpush.msra.mxu0 0.0
        %1232 = vmatpush.msra.mxu0 0.0
        %1233 = vmatpush.msra.mxu0 0.0
        %1234 = vmatpush.msra.mxu0 0.0
        %1235 = vmatpush.msra.mxu0 0.0
        %1236 = vmatpush.msra.mxu0 0.0
        %1237 = vmatpush.msra.mxu0 0.0
        %1238 = vmatpush.msra.mxu0 %v1182
        %1239 = vmatpush.msra.mxu0 %v1180
        %1240 = vmatmul.f32.gmra.mxu0 %v1184
        %v1241 = vpop.f32.mrf.mxu0
        %v1242 = vadd.f32 0.0, %v1241
        %1243 = vmatmul.f32.gmra.mxu0 %v1187
        %v1244 = vpop.f32.mrf.mxu0
        %v1245 = vadd.f32 0.0, %v1244
        %1246 = vmatmul.f32.gmra.mxu0 %v1190
        %v1247 = vpop.f32.mrf.mxu0
        %v1248 = vadd.f32 0.0, %v1247
        %1249 = vmatmul.f32.gmra.mxu0 %v1193
        %v1250 = vpop.f32.mrf.mxu0
        %v1251 = vadd.f32 0.0, %v1250
        %1252 = vdwg.mxu0
        %v1253 = vmul.f32 %v1213, %v325
        %v1254 = vmul.f32 %v1242, %v326
        %v1255 = vmul.f32 %v1216, %v327
        %v1256 = vmul.f32 %v1245, %v328
        %v1257 = vmul.f32 %v1219, %v329
        %v1258 = vmul.f32 %v1248, %v330
        %v1259 = vmul.f32 %v1222, %v331
        %v1260 = vmul.f32 %v1251, %v332
        %1261 = vset.pattern.permute.xlu0 3
        %1262 = vperm.xlu0 %1261, %v460
        %v1263 = vpop.permute.xlu0 %1262
        %1265 = vset.pattern.permute.xlu0 3
        %1266 = vperm.xlu0 %1265, %v461
        %v1267 = vpop.permute.xlu0 %1266
        %1269 = vset.pattern.permute.xlu0 3
        %1270 = vperm.xlu0 %1269, %v462
        %v1271 = vpop.permute.xlu0 %1270
        %1273 = vset.pattern.permute.xlu0 3
        %1274 = vperm.xlu0 %1273, %v463
        %v1275 = vpop.permute.xlu0 %1274
        %1277 = vmatpush.msra.mxu0 %v426
        %1278 = vmatpush.msra.mxu0 %v425
        %1279 = vmatpush.msra.mxu0 %v424
        %1280 = vmatpush.msra.mxu0 %v423
        %1281 = vmatpush.msra.mxu0 %v422
        %1282 = vmatpush.msra.mxu0 %v421
        %1283 = vmatpush.msra.mxu0 %v420
        %1284 = vmatpush.msra.mxu0 %v419
        %1285 = vmatpush.msra.mxu0 %v418
        %1286 = vmatpush.msra.mxu0 %v417
        %1287 = vmatpush.msra.mxu0 %v416
        %1288 = vmatpush.msra.mxu0 %v415
        %1289 = vmatpush.msra.mxu0 %v414
        %1290 = vmatpush.msra.mxu0 %v413
        %1291 = vmatpush.msra.mxu0 %v412
        %1292 = vmatpush.msra.mxu0 %v411
        %1293 = vmatmul.f32.gmra.mxu0 %v1253
        %v1294 = vpop.f32.mrf.mxu0
        %v1295 = vadd.f32 %v1263, %v1294
        %1296 = vmatmul.f32.gmra.mxu0 %v1255
        %v1297 = vpop.f32.mrf.mxu0
        %v1298 = vadd.f32 %v1267, %v1297
        %1299 = vmatmul.f32.gmra.mxu0 %v1257
        %v1300 = vpop.f32.mrf.mxu0
        %v1301 = vadd.f32 %v1271, %v1300
        %1302 = vmatmul.f32.gmra.mxu0 %v1259
        %v1303 = vpop.f32.mrf.mxu0
        %v1304 = vadd.f32 %v1275, %v1303
        %1305 = vdwg.mxu0
        %1306 = vmatpush.msra.mxu0 %v442
        %1307 = vmatpush.msra.mxu0 %v441
        %1308 = vmatpush.msra.mxu0 %v440
        %1309 = vmatpush.msra.mxu0 %v439
        %1310 = vmatpush.msra.mxu0 %v438
        %1311 = vmatpush.msra.mxu0 %v437
        %1312 = vmatpush.msra.mxu0 %v436
        %1313 = vmatpush.msra.mxu0 %v435
        %1314 = vmatpush.msra.mxu0 %v434
        %1315 = vmatpush.msra.mxu0 %v433
        %1316 = vmatpush.msra.mxu0 %v432
        %1317 = vmatpush.msra.mxu0 %v431
        %1318 = vmatpush.msra.mxu0 %v430
        %1319 = vmatpush.msra.mxu0 %v429
        %1320 = vmatpush.msra.mxu0 %v428
        %1321 = vmatpush.msra.mxu0 %v427
        %1322 = vmatmul.f32.gmra.mxu0 %v1254
        %v1323 = vpop.f32.mrf.mxu0
        %v1324 = vadd.f32 %v1295, %v1323
        %1325 = vmatmul.f32.gmra.mxu0 %v1256
        %v1326 = vpop.f32.mrf.mxu0
        %v1327 = vadd.f32 %v1298, %v1326
        %1328 = vmatmul.f32.gmra.mxu0 %v1258
        %v1329 = vpop.f32.mrf.mxu0
        %v1330 = vadd.f32 %v1301, %v1329
        %1331 = vmatmul.f32.gmra.mxu0 %v1260
        %v1332 = vpop.f32.mrf.mxu0
        %v1333 = vadd.f32 %v1304, %v1332
        %1334 = vdwg.mxu0
        %vm1335 = vcmp.gt.f32.partialorder %v1324, 0.0
        %vm1336 = vcmp.gt.f32.partialorder %v1327, 0.0
        %vm1337 = vcmp.gt.f32.partialorder %v1330, 0.0
        %vm1338 = vcmp.gt.f32.partialorder %v1333, 0.0
        %v1339 = vmin.f32 %v1324, 0.0
        %v1340 = vmin.f32 %v1327, 0.0
        %v1341 = vmin.f32 %v1330, 0.0
        %v1342 = vmin.f32 %v1333, 0.0
        %v1343 = vmul.f32 %v1339, 1.442695
        %v1344 = vpow.pop %v1343
        %v1345 = vmul.f32 %v1340, 1.442695
        %v1346 = vpow.pop %v1345
        %v1347 = vmul.f32 %v1341, 1.442695
        %v1348 = vpow.pop %v1347
        %v1349 = vmul.f32 %v1342, 1.442695
        %v1350 = vpow.pop %v1349
        %v1351 = vsub.f32 %v1344, 1.0
        %v1352 = vsub.f32 %v1346, 1.0
        %v1353 = vsub.f32 %v1348, 1.0
        %v1354 = vsub.f32 %v1350, 1.0
        %v1355 = vsel %vm1335, %v1324, %v1351
        %v1356 = vsel %vm1336, %v1327, %v1352
        %v1357 = vsel %vm1337, %v1330, %v1353
        %v1358 = vsel %vm1338, %v1333, %v1354
        %v1359 = vadd.f32 %v1355, %v1175
        %v1360 = vadd.f32 %v1356, %v1176
        %v1361 = vadd.f32 %v1357, %v1177
        %v1362 = vadd.f32 %v1358, %v1178
        %v1363 = vld [vmem:[%s2 + $0x60] sm:$0xff]
        %v1364 = vld [vmem:[%s2 + $0x68] sm:$0xff]
        %v1365 = vld [vmem:[%s2 + $0x70] sm:$0xff]
        %v1366 = vld [vmem:[%s2 + $0x78] sm:$0xff]
        %v1368 = vsel %vm467, %v1359, 0
        %v1371 = vsel %vm467, %v1360, 0
        %v1374 = vsel %vm467, %v1361, 0
        %v1377 = vsel %vm467, %v1362, 0
        %1379 = vmatpush.msra.mxu0 0.0
        %1380 = vmatpush.msra.mxu0 0.0
        %1381 = vmatpush.msra.mxu0 0.0
        %1382 = vmatpush.msra.mxu0 0.0
        %1383 = vmatpush.msra.mxu0 0.0
        %1384 = vmatpush.msra.mxu0 0.0
        %1385 = vmatpush.msra.mxu0 0.0
        %1386 = vmatpush.msra.mxu0 0.0
        %1387 = vmatpush.msra.mxu0 0.0
        %1388 = vmatpush.msra.mxu0 0.0
        %1389 = vmatpush.msra.mxu0 0.0
        %1390 = vmatpush.msra.mxu0 0.0
        %1391 = vmatpush.msra.mxu0 0.0
        %1392 = vmatpush.msra.mxu0 0.0
        %1393 = vmatpush.msra.mxu0 %v1365
        %1394 = vmatpush.msra.mxu0 %v1363
        %1395 = vmatmul.f32.gmra.mxu0 %v1368
        %v1396 = vpop.f32.mrf.mxu0
        %v1397 = vadd.f32 0.0, %v1396
        %1398 = vmatmul.f32.gmra.mxu0 %v1371
        %v1399 = vpop.f32.mrf.mxu0
        %v1400 = vadd.f32 0.0, %v1399
        %1401 = vmatmul.f32.gmra.mxu0 %v1374
        %v1402 = vpop.f32.mrf.mxu0
        %v1403 = vadd.f32 0.0, %v1402
        %1404 = vmatmul.f32.gmra.mxu0 %v1377
        %v1405 = vpop.f32.mrf.mxu0
        %v1406 = vadd.f32 0.0, %v1405
        %1407 = vdwg.mxu0
        %1408 = vmatpush.msra.mxu0 0.0
        %1409 = vmatpush.msra.mxu0 0.0
        %1410 = vmatpush.msra.mxu0 0.0
        %1411 = vmatpush.msra.mxu0 0.0
        %1412 = vmatpush.msra.mxu0 0.0
        %1413 = vmatpush.msra.mxu0 0.0
        %1414 = vmatpush.msra.mxu0 0.0
        %1415 = vmatpush.msra.mxu0 0.0
        %1416 = vmatpush.msra.mxu0 0.0
        %1417 = vmatpush.msra.mxu0 0.0
        %1418 = vmatpush.msra.mxu0 0.0
        %1419 = vmatpush.msra.mxu0 0.0
        %1420 = vmatpush.msra.mxu0 0.0
        %1421 = vmatpush.msra.mxu0 0.0
        %1422 = vmatpush.msra.mxu0 %v1366
        %1423 = vmatpush.msra.mxu0 %v1364
        %1424 = vmatmul.f32.gmra.mxu0 %v1368
        %v1425 = vpop.f32.mrf.mxu0
        %v1426 = vadd.f32 0.0, %v1425
        %1427 = vmatmul.f32.gmra.mxu0 %v1371
        %v1428 = vpop.f32.mrf.mxu0
        %v1429 = vadd.f32 0.0, %v1428
        %1430 = vmatmul.f32.gmra.mxu0 %v1374
        %v1431 = vpop.f32.mrf.mxu0
        %v1432 = vadd.f32 0.0, %v1431
        %1433 = vmatmul.f32.gmra.mxu0 %v1377
        %v1434 = vpop.f32.mrf.mxu0
        %v1435 = vadd.f32 0.0, %v1434
        %1436 = vdwg.mxu0
        %v1437 = vmul.f32 %v1397, %v325
        %v1438 = vmul.f32 %v1426, %v326
        %v1439 = vmul.f32 %v1400, %v327
        %v1440 = vmul.f32 %v1429, %v328
        %v1441 = vmul.f32 %v1403, %v329
        %v1442 = vmul.f32 %v1432, %v330
        %v1443 = vmul.f32 %v1406, %v331
        %v1444 = vmul.f32 %v1435, %v332
        %1445 = vset.pattern.permute.xlu0 4
        %1446 = vperm.xlu0 %1445, %v460
        %v1447 = vpop.permute.xlu0 %1446
        %1449 = vset.pattern.permute.xlu0 4
        %1450 = vperm.xlu0 %1449, %v461
        %v1451 = vpop.permute.xlu0 %1450
        %1453 = vset.pattern.permute.xlu0 4
        %1454 = vperm.xlu0 %1453, %v462
        %v1455 = vpop.permute.xlu0 %1454
        %1457 = vset.pattern.permute.xlu0 4
        %1458 = vperm.xlu0 %1457, %v463
        %v1459 = vpop.permute.xlu0 %1458
        %1461 = vmatpush.msra.mxu0 %v426
        %1462 = vmatpush.msra.mxu0 %v425
        %1463 = vmatpush.msra.mxu0 %v424
        %1464 = vmatpush.msra.mxu0 %v423
        %1465 = vmatpush.msra.mxu0 %v422
        %1466 = vmatpush.msra.mxu0 %v421
        %1467 = vmatpush.msra.mxu0 %v420
        %1468 = vmatpush.msra.mxu0 %v419
        %1469 = vmatpush.msra.mxu0 %v418
        %1470 = vmatpush.msra.mxu0 %v417
        %1471 = vmatpush.msra.mxu0 %v416
        %1472 = vmatpush.msra.mxu0 %v415
        %1473 = vmatpush.msra.mxu0 %v414
        %1474 = vmatpush.msra.mxu0 %v413
        %1475 = vmatpush.msra.mxu0 %v412
        %1476 = vmatpush.msra.mxu0 %v411
        %1477 = vmatmul.f32.gmra.mxu0 %v1437
        %v1478 = vpop.f32.mrf.mxu0
        %v1479 = vadd.f32 %v1447, %v1478
        %1480 = vmatmul.f32.gmra.mxu0 %v1439
        %v1481 = vpop.f32.mrf.mxu0
        %v1482 = vadd.f32 %v1451, %v1481
        %1483 = vmatmul.f32.gmra.mxu0 %v1441
        %v1484 = vpop.f32.mrf.mxu0
        %v1485 = vadd.f32 %v1455, %v1484
        %1486 = vmatmul.f32.gmra.mxu0 %v1443
        %v1487 = vpop.f32.mrf.mxu0
        %v1488 = vadd.f32 %v1459, %v1487
        %1489 = vdwg.mxu0
        %1490 = vmatpush.msra.mxu0 %v442
        %1491 = vmatpush.msra.mxu0 %v441
        %1492 = vmatpush.msra.mxu0 %v440
        %1493 = vmatpush.msra.mxu0 %v439
        %1494 = vmatpush.msra.mxu0 %v438
        %1495 = vmatpush.msra.mxu0 %v437
        %1496 = vmatpush.msra.mxu0 %v436
        %1497 = vmatpush.msra.mxu0 %v435
        %1498 = vmatpush.msra.mxu0 %v434
        %1499 = vmatpush.msra.mxu0 %v433
        %1500 = vmatpush.msra.mxu0 %v432
        %1501 = vmatpush.msra.mxu0 %v431
        %1502 = vmatpush.msra.mxu0 %v430
        %1503 = vmatpush.msra.mxu0 %v429
        %1504 = vmatpush.msra.mxu0 %v428
        %1505 = vmatpush.msra.mxu0 %v427
        %1506 = vmatmul.f32.gmra.mxu0 %v1438
        %v1507 = vpop.f32.mrf.mxu0
        %v1508 = vadd.f32 %v1479, %v1507
        %1509 = vmatmul.f32.gmra.mxu0 %v1440
        %v1510 = vpop.f32.mrf.mxu0
        %v1511 = vadd.f32 %v1482, %v1510
        %1512 = vmatmul.f32.gmra.mxu0 %v1442
        %v1513 = vpop.f32.mrf.mxu0
        %v1514 = vadd.f32 %v1485, %v1513
        %1515 = vmatmul.f32.gmra.mxu0 %v1444
        %v1516 = vpop.f32.mrf.mxu0
        %v1517 = vadd.f32 %v1488, %v1516
        %1518 = vdwg.mxu0
        %vm1519 = vcmp.gt.f32.partialorder %v1508, 0.0
        %vm1520 = vcmp.gt.f32.partialorder %v1511, 0.0
        %vm1521 = vcmp.gt.f32.partialorder %v1514, 0.0
        %vm1522 = vcmp.gt.f32.partialorder %v1517, 0.0
        %v1523 = vmin.f32 %v1508, 0.0
        %v1524 = vmin.f32 %v1511, 0.0
        %v1525 = vmin.f32 %v1514, 0.0
        %v1526 = vmin.f32 %v1517, 0.0
        %v1527 = vmul.f32 %v1523, 1.442695
        %v1528 = vpow.pop %v1527
        %v1529 = vmul.f32 %v1524, 1.442695
        %v1530 = vpow.pop %v1529
        %v1531 = vmul.f32 %v1525, 1.442695
        %v1532 = vpow.pop %v1531
        %v1533 = vmul.f32 %v1526, 1.442695
        %v1534 = vpow.pop %v1533
        %v1535 = vsub.f32 %v1528, 1.0
        %v1536 = vsub.f32 %v1530, 1.0
        %v1537 = vsub.f32 %v1532, 1.0
        %v1538 = vsub.f32 %v1534, 1.0
        %v1539 = vsel %vm1519, %v1508, %v1535
        %v1540 = vsel %vm1520, %v1511, %v1536
        %v1541 = vsel %vm1521, %v1514, %v1537
        %v1542 = vsel %vm1522, %v1517, %v1538
        %v1543 = vadd.f32 %v1539, %v1359
        %v1544 = vadd.f32 %v1540, %v1360
        %v1545 = vadd.f32 %v1541, %v1361
        %v1546 = vadd.f32 %v1542, %v1362
        %v1547 = vld [vmem:[%s2 + $0x80] sm:$0xff]
        %v1548 = vld [vmem:[%s2 + $0x88] sm:$0xff]
        %v1549 = vld [vmem:[%s2 + $0x90] sm:$0xff]
        %v1550 = vld [vmem:[%s2 + $0x98] sm:$0xff]
        %v1552 = vsel %vm467, %v1543, 0
        %v1555 = vsel %vm467, %v1544, 0
        %v1558 = vsel %vm467, %v1545, 0
        %v1561 = vsel %vm467, %v1546, 0
        %1563 = vmatpush.msra.mxu0 0.0
        %1564 = vmatpush.msra.mxu0 0.0
        %1565 = vmatpush.msra.mxu0 0.0
        %1566 = vmatpush.msra.mxu0 0.0
        %1567 = vmatpush.msra.mxu0 0.0
        %1568 = vmatpush.msra.mxu0 0.0
        %1569 = vmatpush.msra.mxu0 0.0
        %1570 = vmatpush.msra.mxu0 0.0
        %1571 = vmatpush.msra.mxu0 0.0
        %1572 = vmatpush.msra.mxu0 0.0
        %1573 = vmatpush.msra.mxu0 0.0
        %1574 = vmatpush.msra.mxu0 0.0
        %1575 = vmatpush.msra.mxu0 0.0
        %1576 = vmatpush.msra.mxu0 0.0
        %1577 = vmatpush.msra.mxu0 %v1549
        %1578 = vmatpush.msra.mxu0 %v1547
        %1579 = vmatmul.f32.gmra.mxu0 %v1552
        %v1580 = vpop.f32.mrf.mxu0
        %v1581 = vadd.f32 0.0, %v1580
        %1582 = vmatmul.f32.gmra.mxu0 %v1555
        %v1583 = vpop.f32.mrf.mxu0
        %v1584 = vadd.f32 0.0, %v1583
        %1585 = vmatmul.f32.gmra.mxu0 %v1558
        %v1586 = vpop.f32.mrf.mxu0
        %v1587 = vadd.f32 0.0, %v1586
        %1588 = vmatmul.f32.gmra.mxu0 %v1561
        %v1589 = vpop.f32.mrf.mxu0
        %v1590 = vadd.f32 0.0, %v1589
        %1591 = vdwg.mxu0
        %1592 = vmatpush.msra.mxu0 0.0
        %1593 = vmatpush.msra.mxu0 0.0
        %1594 = vmatpush.msra.mxu0 0.0
        %1595 = vmatpush.msra.mxu0 0.0
        %1596 = vmatpush.msra.mxu0 0.0
        %1597 = vmatpush.msra.mxu0 0.0
        %1598 = vmatpush.msra.mxu0 0.0
        %1599 = vmatpush.msra.mxu0 0.0
        %1600 = vmatpush.msra.mxu0 0.0
        %1601 = vmatpush.msra.mxu0 0.0
        %1602 = vmatpush.msra.mxu0 0.0
        %1603 = vmatpush.msra.mxu0 0.0
        %1604 = vmatpush.msra.mxu0 0.0
        %1605 = vmatpush.msra.mxu0 0.0
        %1606 = vmatpush.msra.mxu0 %v1550
        %1607 = vmatpush.msra.mxu0 %v1548
        %1608 = vmatmul.f32.gmra.mxu0 %v1552
        %v1609 = vpop.f32.mrf.mxu0
        %v1610 = vadd.f32 0.0, %v1609
        %1611 = vmatmul.f32.gmra.mxu0 %v1555
        %v1612 = vpop.f32.mrf.mxu0
        %v1613 = vadd.f32 0.0, %v1612
        %1614 = vmatmul.f32.gmra.mxu0 %v1558
        %v1615 = vpop.f32.mrf.mxu0
        %v1616 = vadd.f32 0.0, %v1615
        %1617 = vmatmul.f32.gmra.mxu0 %v1561
        %v1618 = vpop.f32.mrf.mxu0
        %v1619 = vadd.f32 0.0, %v1618
        %1620 = vdwg.mxu0
        %v1621 = vmul.f32 %v1581, %v325
        %v1622 = vmul.f32 %v1610, %v326
        %v1623 = vmul.f32 %v1584, %v327
        %v1624 = vmul.f32 %v1613, %v328
        %v1625 = vmul.f32 %v1587, %v329
        %v1626 = vmul.f32 %v1616, %v330
        %v1627 = vmul.f32 %v1590, %v331
        %v1628 = vmul.f32 %v1619, %v332
        %1629 = vset.pattern.permute.xlu0 5
        %1630 = vperm.xlu0 %1629, %v460
        %v1631 = vpop.permute.xlu0 %1630
        %1633 = vset.pattern.permute.xlu0 5
        %1634 = vperm.xlu0 %1633, %v461
        %v1635 = vpop.permute.xlu0 %1634
        %1637 = vset.pattern.permute.xlu0 5
        %1638 = vperm.xlu0 %1637, %v462
        %v1639 = vpop.permute.xlu0 %1638
        %1641 = vset.pattern.permute.xlu0 5
        %1642 = vperm.xlu0 %1641, %v463
        %v1643 = vpop.permute.xlu0 %1642
        %1645 = vmatpush.msra.mxu0 %v426
        %1646 = vmatpush.msra.mxu0 %v425
        %1647 = vmatpush.msra.mxu0 %v424
        %1648 = vmatpush.msra.mxu0 %v423
        %1649 = vmatpush.msra.mxu0 %v422
        %1650 = vmatpush.msra.mxu0 %v421
        %1651 = vmatpush.msra.mxu0 %v420
        %1652 = vmatpush.msra.mxu0 %v419
        %1653 = vmatpush.msra.mxu0 %v418
        %1654 = vmatpush.msra.mxu0 %v417
        %1655 = vmatpush.msra.mxu0 %v416
        %1656 = vmatpush.msra.mxu0 %v415
        %1657 = vmatpush.msra.mxu0 %v414
        %1658 = vmatpush.msra.mxu0 %v413
        %1659 = vmatpush.msra.mxu0 %v412
        %1660 = vmatpush.msra.mxu0 %v411
        %1661 = vmatmul.f32.gmra.mxu0 %v1621
        %v1662 = vpop.f32.mrf.mxu0
        %v1663 = vadd.f32 %v1631, %v1662
        %1664 = vmatmul.f32.gmra.mxu0 %v1623
        %v1665 = vpop.f32.mrf.mxu0
        %v1666 = vadd.f32 %v1635, %v1665
        %1667 = vmatmul.f32.gmra.mxu0 %v1625
        %v1668 = vpop.f32.mrf.mxu0
        %v1669 = vadd.f32 %v1639, %v1668
        %1670 = vmatmul.f32.gmra.mxu0 %v1627
        %v1671 = vpop.f32.mrf.mxu0
        %v1672 = vadd.f32 %v1643, %v1671
        %1673 = vdwg.mxu0
        %1674 = vmatpush.msra.mxu0 %v442
        %1675 = vmatpush.msra.mxu0 %v441
        %1676 = vmatpush.msra.mxu0 %v440
        %1677 = vmatpush.msra.mxu0 %v439
        %1678 = vmatpush.msra.mxu0 %v438
        %1679 = vmatpush.msra.mxu0 %v437
        %1680 = vmatpush.msra.mxu0 %v436
        %1681 = vmatpush.msra.mxu0 %v435
        %1682 = vmatpush.msra.mxu0 %v434
        %1683 = vmatpush.msra.mxu0 %v433
        %1684 = vmatpush.msra.mxu0 %v432
        %1685 = vmatpush.msra.mxu0 %v431
        %1686 = vmatpush.msra.mxu0 %v430
        %1687 = vmatpush.msra.mxu0 %v429
        %1688 = vmatpush.msra.mxu0 %v428
        %1689 = vmatpush.msra.mxu0 %v427
        %1690 = vmatmul.f32.gmra.mxu0 %v1622
        %v1691 = vpop.f32.mrf.mxu0
        %v1692 = vadd.f32 %v1663, %v1691
        %1693 = vmatmul.f32.gmra.mxu0 %v1624
        %v1694 = vpop.f32.mrf.mxu0
        %v1695 = vadd.f32 %v1666, %v1694
        %1696 = vmatmul.f32.gmra.mxu0 %v1626
        %v1697 = vpop.f32.mrf.mxu0
        %v1698 = vadd.f32 %v1669, %v1697
        %1699 = vmatmul.f32.gmra.mxu0 %v1628
        %v1700 = vpop.f32.mrf.mxu0
        %v1701 = vadd.f32 %v1672, %v1700
        %1702 = vdwg.mxu0
        %vm1703 = vcmp.gt.f32.partialorder %v1692, 0.0
        %vm1704 = vcmp.gt.f32.partialorder %v1695, 0.0
        %vm1705 = vcmp.gt.f32.partialorder %v1698, 0.0
        %vm1706 = vcmp.gt.f32.partialorder %v1701, 0.0
        %v1707 = vmin.f32 %v1692, 0.0
        %v1708 = vmin.f32 %v1695, 0.0
        %v1709 = vmin.f32 %v1698, 0.0
        %v1710 = vmin.f32 %v1701, 0.0
        %v1711 = vmul.f32 %v1707, 1.442695
        %v1712 = vpow.pop %v1711
        %v1713 = vmul.f32 %v1708, 1.442695
        %v1714 = vpow.pop %v1713
        %v1715 = vmul.f32 %v1709, 1.442695
        %v1716 = vpow.pop %v1715
        %v1717 = vmul.f32 %v1710, 1.442695
        %v1718 = vpow.pop %v1717
        %v1719 = vsub.f32 %v1712, 1.0
        %v1720 = vsub.f32 %v1714, 1.0
        %v1721 = vsub.f32 %v1716, 1.0
        %v1722 = vsub.f32 %v1718, 1.0
        %v1723 = vsel %vm1703, %v1692, %v1719
        %v1724 = vsel %vm1704, %v1695, %v1720
        %v1725 = vsel %vm1705, %v1698, %v1721
        %v1726 = vsel %vm1706, %v1701, %v1722
        %v1727 = vadd.f32 %v1723, %v1543
        %v1728 = vadd.f32 %v1724, %v1544
        %v1729 = vadd.f32 %v1725, %v1545
        %v1730 = vadd.f32 %v1726, %v1546
        %v1731 = vld [vmem:[%s2 + $0xa0] sm:$0xff]
        %v1732 = vld [vmem:[%s2 + $0xa8] sm:$0xff]
        %v1733 = vld [vmem:[%s2 + $0xb0] sm:$0xff]
        %v1734 = vld [vmem:[%s2 + $0xb8] sm:$0xff]
        %v1736 = vsel %vm467, %v1727, 0
        %v1739 = vsel %vm467, %v1728, 0
        %v1742 = vsel %vm467, %v1729, 0
        %v1745 = vsel %vm467, %v1730, 0
        %1747 = vmatpush.msra.mxu0 0.0
        %1748 = vmatpush.msra.mxu0 0.0
        %1749 = vmatpush.msra.mxu0 0.0
        %1750 = vmatpush.msra.mxu0 0.0
        %1751 = vmatpush.msra.mxu0 0.0
        %1752 = vmatpush.msra.mxu0 0.0
        %1753 = vmatpush.msra.mxu0 0.0
        %1754 = vmatpush.msra.mxu0 0.0
        %1755 = vmatpush.msra.mxu0 0.0
        %1756 = vmatpush.msra.mxu0 0.0
        %1757 = vmatpush.msra.mxu0 0.0
        %1758 = vmatpush.msra.mxu0 0.0
        %1759 = vmatpush.msra.mxu0 0.0
        %1760 = vmatpush.msra.mxu0 0.0
        %1761 = vmatpush.msra.mxu0 %v1733
        %1762 = vmatpush.msra.mxu0 %v1731
        %1763 = vmatmul.f32.gmra.mxu0 %v1736
        %v1764 = vpop.f32.mrf.mxu0
        %v1765 = vadd.f32 0.0, %v1764
        %1766 = vmatmul.f32.gmra.mxu0 %v1739
        %v1767 = vpop.f32.mrf.mxu0
        %v1768 = vadd.f32 0.0, %v1767
        %1769 = vmatmul.f32.gmra.mxu0 %v1742
        %v1770 = vpop.f32.mrf.mxu0
        %v1771 = vadd.f32 0.0, %v1770
        %1772 = vmatmul.f32.gmra.mxu0 %v1745
        %v1773 = vpop.f32.mrf.mxu0
        %v1774 = vadd.f32 0.0, %v1773
        %1775 = vdwg.mxu0
        %1776 = vmatpush.msra.mxu0 0.0
        %1777 = vmatpush.msra.mxu0 0.0
        %1778 = vmatpush.msra.mxu0 0.0
        %1779 = vmatpush.msra.mxu0 0.0
        %1780 = vmatpush.msra.mxu0 0.0
        %1781 = vmatpush.msra.mxu0 0.0
        %1782 = vmatpush.msra.mxu0 0.0
        %1783 = vmatpush.msra.mxu0 0.0
        %1784 = vmatpush.msra.mxu0 0.0
        %1785 = vmatpush.msra.mxu0 0.0
        %1786 = vmatpush.msra.mxu0 0.0
        %1787 = vmatpush.msra.mxu0 0.0
        %1788 = vmatpush.msra.mxu0 0.0
        %1789 = vmatpush.msra.mxu0 0.0
        %1790 = vmatpush.msra.mxu0 %v1734
        %1791 = vmatpush.msra.mxu0 %v1732
        %1792 = vmatmul.f32.gmra.mxu0 %v1736
        %v1793 = vpop.f32.mrf.mxu0
        %v1794 = vadd.f32 0.0, %v1793
        %1795 = vmatmul.f32.gmra.mxu0 %v1739
        %v1796 = vpop.f32.mrf.mxu0
        %v1797 = vadd.f32 0.0, %v1796
        %1798 = vmatmul.f32.gmra.mxu0 %v1742
        %v1799 = vpop.f32.mrf.mxu0
        %v1800 = vadd.f32 0.0, %v1799
        %1801 = vmatmul.f32.gmra.mxu0 %v1745
        %v1802 = vpop.f32.mrf.mxu0
        %v1803 = vadd.f32 0.0, %v1802
        %1804 = vdwg.mxu0
        %v1805 = vmul.f32 %v1765, %v325
        %v1806 = vmul.f32 %v1794, %v326
        %v1807 = vmul.f32 %v1768, %v327
        %v1808 = vmul.f32 %v1797, %v328
        %v1809 = vmul.f32 %v1771, %v329
        %v1810 = vmul.f32 %v1800, %v330
        %v1811 = vmul.f32 %v1774, %v331
        %v1812 = vmul.f32 %v1803, %v332
        %1813 = vset.pattern.permute.xlu0 6
        %1814 = vperm.xlu0 %1813, %v460
        %v1815 = vpop.permute.xlu0 %1814
        %1817 = vset.pattern.permute.xlu0 6
        %1818 = vperm.xlu0 %1817, %v461
        %v1819 = vpop.permute.xlu0 %1818
        %1821 = vset.pattern.permute.xlu0 6
        %1822 = vperm.xlu0 %1821, %v462
        %v1823 = vpop.permute.xlu0 %1822
        %1825 = vset.pattern.permute.xlu0 6
        %1826 = vperm.xlu0 %1825, %v463
        %v1827 = vpop.permute.xlu0 %1826
        %1829 = vmatpush.msra.mxu0 %v426
        %1830 = vmatpush.msra.mxu0 %v425
        %1831 = vmatpush.msra.mxu0 %v424
        %1832 = vmatpush.msra.mxu0 %v423
        %1833 = vmatpush.msra.mxu0 %v422
        %1834 = vmatpush.msra.mxu0 %v421
        %1835 = vmatpush.msra.mxu0 %v420
        %1836 = vmatpush.msra.mxu0 %v419
        %1837 = vmatpush.msra.mxu0 %v418
        %1838 = vmatpush.msra.mxu0 %v417
        %1839 = vmatpush.msra.mxu0 %v416
        %1840 = vmatpush.msra.mxu0 %v415
        %1841 = vmatpush.msra.mxu0 %v414
        %1842 = vmatpush.msra.mxu0 %v413
        %1843 = vmatpush.msra.mxu0 %v412
        %1844 = vmatpush.msra.mxu0 %v411
        %1845 = vmatmul.f32.gmra.mxu0 %v1805
        %v1846 = vpop.f32.mrf.mxu0
        %v1847 = vadd.f32 %v1815, %v1846
        %1848 = vmatmul.f32.gmra.mxu0 %v1807
        %v1849 = vpop.f32.mrf.mxu0
        %v1850 = vadd.f32 %v1819, %v1849
        %1851 = vmatmul.f32.gmra.mxu0 %v1809
        %v1852 = vpop.f32.mrf.mxu0
        %v1853 = vadd.f32 %v1823, %v1852
        %1854 = vmatmul.f32.gmra.mxu0 %v1811
        %v1855 = vpop.f32.mrf.mxu0
        %v1856 = vadd.f32 %v1827, %v1855
        %1857 = vdwg.mxu0
        %1858 = vmatpush.msra.mxu0 %v442
        %1859 = vmatpush.msra.mxu0 %v441
        %1860 = vmatpush.msra.mxu0 %v440
        %1861 = vmatpush.msra.mxu0 %v439
        %1862 = vmatpush.msra.mxu0 %v438
        %1863 = vmatpush.msra.mxu0 %v437
        %1864 = vmatpush.msra.mxu0 %v436
        %1865 = vmatpush.msra.mxu0 %v435
        %1866 = vmatpush.msra.mxu0 %v434
        %1867 = vmatpush.msra.mxu0 %v433
        %1868 = vmatpush.msra.mxu0 %v432
        %1869 = vmatpush.msra.mxu0 %v431
        %1870 = vmatpush.msra.mxu0 %v430
        %1871 = vmatpush.msra.mxu0 %v429
        %1872 = vmatpush.msra.mxu0 %v428
        %1873 = vmatpush.msra.mxu0 %v427
        %1874 = vmatmul.f32.gmra.mxu0 %v1806
        %v1875 = vpop.f32.mrf.mxu0
        %v1876 = vadd.f32 %v1847, %v1875
        %1877 = vmatmul.f32.gmra.mxu0 %v1808
        %v1878 = vpop.f32.mrf.mxu0
        %v1879 = vadd.f32 %v1850, %v1878
        %1880 = vmatmul.f32.gmra.mxu0 %v1810
        %v1881 = vpop.f32.mrf.mxu0
        %v1882 = vadd.f32 %v1853, %v1881
        %1883 = vmatmul.f32.gmra.mxu0 %v1812
        %v1884 = vpop.f32.mrf.mxu0
        %v1885 = vadd.f32 %v1856, %v1884
        %1886 = vdwg.mxu0
        %vm1887 = vcmp.gt.f32.partialorder %v1876, 0.0
        %vm1888 = vcmp.gt.f32.partialorder %v1879, 0.0
        %vm1889 = vcmp.gt.f32.partialorder %v1882, 0.0
        %vm1890 = vcmp.gt.f32.partialorder %v1885, 0.0
        %v1891 = vmin.f32 %v1876, 0.0
        %v1892 = vmin.f32 %v1879, 0.0
        %v1893 = vmin.f32 %v1882, 0.0
        %v1894 = vmin.f32 %v1885, 0.0
        %v1895 = vmul.f32 %v1891, 1.442695
        %v1896 = vpow.pop %v1895
        %v1897 = vmul.f32 %v1892, 1.442695
        %v1898 = vpow.pop %v1897
        %v1899 = vmul.f32 %v1893, 1.442695
        %v1900 = vpow.pop %v1899
        %v1901 = vmul.f32 %v1894, 1.442695
        %v1902 = vpow.pop %v1901
        %v1903 = vsub.f32 %v1896, 1.0
        %v1904 = vsub.f32 %v1898, 1.0
        %v1905 = vsub.f32 %v1900, 1.0
        %v1906 = vsub.f32 %v1902, 1.0
        %v1907 = vsel %vm1887, %v1876, %v1903
        %v1908 = vsel %vm1888, %v1879, %v1904
        %v1909 = vsel %vm1889, %v1882, %v1905
        %v1910 = vsel %vm1890, %v1885, %v1906
        %v1911 = vadd.f32 %v1907, %v1727
        %v1912 = vadd.f32 %v1908, %v1728
        %v1913 = vadd.f32 %v1909, %v1729
        %v1914 = vadd.f32 %v1910, %v1730
        %1915 = vset.pattern.permute.xlu0 1
        %1916 = vperm.xlu0 %1915, %v460
        %v1917 = vpop.permute.xlu0 %1916
        %1919 = vset.pattern.permute.xlu0 1
        %1920 = vperm.xlu0 %1919, %v461
        %v1921 = vpop.permute.xlu0 %1920
        %1923 = vset.pattern.permute.xlu0 1
        %1924 = vperm.xlu0 %1923, %v462
        %v1925 = vpop.permute.xlu0 %1924
        %1927 = vset.pattern.permute.xlu0 1
        %1928 = vperm.xlu0 %1927, %v463
        %v1929 = vpop.permute.xlu0 %1928
        %vm1931 = vcmask 261120
        %v1933 = vsel %vm1931, %v447, 0
        %v1936 = vsel %vm1931, %v448, 0
        %v1939 = vsel %vm1931, %v449, 0
        %v1942 = vsel %vm1931, %v450, 0
        %1944 = vmatpush.msra.mxu0 0.0
        %1945 = vmatpush.msra.mxu0 0.0
        %1946 = vmatpush.msra.mxu0 0.0
        %1947 = vmatpush.msra.mxu0 0.0
        %1948 = vmatpush.msra.mxu0 0.0
        %1949 = vmatpush.msra.mxu0 0.0
        %1950 = vmatpush.msra.mxu0 0.0
        %1951 = vmatpush.msra.mxu0 0.0
        %1952 = vmatpush.msra.mxu0 0.0
        %1953 = vmatpush.msra.mxu0 0.0
        %1954 = vmatpush.msra.mxu0 0.0
        %1955 = vmatpush.msra.mxu0 0.0
        %1956 = vmatpush.msra.mxu0 %v1914
        %1957 = vmatpush.msra.mxu0 %v1913
        %1958 = vmatpush.msra.mxu0 %v1912
        %1959 = vmatpush.msra.mxu0 %v1911
        %1960 = vmatmul.f32.gmra.mxu0 %v1933
        %v1961 = vpop.f32.mrf.mxu0
        %v1962 = vadd.f32 %v1917, %v1961
        %1963 = vmatmul.f32.gmra.mxu0 %v1936
        %v1964 = vpop.f32.mrf.mxu0
        %v1965 = vadd.f32 %v1921, %v1964
        %1966 = vmatmul.f32.gmra.mxu0 %v1939
        %v1967 = vpop.f32.mrf.mxu0
        %v1968 = vadd.f32 %v1925, %v1967
        %1969 = vmatmul.f32.gmra.mxu0 %v1942
        %v1970 = vpop.f32.mrf.mxu0
        %v1971 = vadd.f32 %v1929, %v1970
        %1972 = vdwg.mxu0
        %vm1973 = vcmp.gt.f32.partialorder %v1962, 0.0
        %vm1974 = vcmp.gt.f32.partialorder %v1965, 0.0
        %vm1975 = vcmp.gt.f32.partialorder %v1968, 0.0
        %vm1976 = vcmp.gt.f32.partialorder %v1971, 0.0
        %v1977 = vmin.f32 %v1962, 0.0
        %v1978 = vmin.f32 %v1965, 0.0
        %v1979 = vmin.f32 %v1968, 0.0
        %v1980 = vmin.f32 %v1971, 0.0
        %v1981 = vmul.f32 %v1977, 1.442695
        %v1982 = vpow.pop %v1981
        %v1983 = vmul.f32 %v1978, 1.442695
        %v1984 = vpow.pop %v1983
        %v1985 = vmul.f32 %v1979, 1.442695
        %v1986 = vpow.pop %v1985
        %v1987 = vmul.f32 %v1980, 1.442695
        %v1988 = vpow.pop %v1987
        %v1989 = vsub.f32 %v1982, 1.0
        %v1990 = vsub.f32 %v1984, 1.0
        %v1991 = vsub.f32 %v1986, 1.0
        %v1992 = vsub.f32 %v1988, 1.0
        %v1993 = vsel %vm1973, %v1962, %v1989
        %v1994 = vsel %vm1974, %v1965, %v1990
        %v1995 = vsel %vm1975, %v1968, %v1991
        %v1996 = vsel %vm1976, %v1971, %v1992
        %v1998 = vsel %vm467, %v1993, 0
        %v2001 = vsel %vm467, %v1994, 0
        %v2004 = vsel %vm467, %v1995, 0
        %v2007 = vsel %vm467, %v1996, 0
        %2009 = vmatpush.msra.mxu0 0.0
        %2010 = vmatpush.msra.mxu0 0.0
        %2011 = vmatpush.msra.mxu0 0.0
        %2012 = vmatpush.msra.mxu0 0.0
        %2013 = vmatpush.msra.mxu0 0.0
        %2014 = vmatpush.msra.mxu0 0.0
        %2015 = vmatpush.msra.mxu0 0.0
        %2016 = vmatpush.msra.mxu0 0.0
        %2017 = vmatpush.msra.mxu0 0.0
        %2018 = vmatpush.msra.mxu0 0.0
        %2019 = vmatpush.msra.mxu0 0.0
        %2020 = vmatpush.msra.mxu0 0.0
        %2021 = vmatpush.msra.mxu0 0.0
        %2022 = vmatpush.msra.mxu0 0.0
        %2023 = vmatpush.msra.mxu0 %v398
        %2024 = vmatpush.msra.mxu0 %v397
        %2025 = vmatmul.f32.gmra.mxu0 %v1998
        %v2026 = vpop.f32.mrf.mxu0
        %v2027 = vadd.f32 0.0, %v2026
        %2028 = vmatmul.f32.gmra.mxu0 %v2001
        %v2029 = vpop.f32.mrf.mxu0
        %v2030 = vadd.f32 0.0, %v2029
        %2031 = vmatmul.f32.gmra.mxu0 %v2004
        %v2032 = vpop.f32.mrf.mxu0
        %v2033 = vadd.f32 0.0, %v2032
        %2034 = vmatmul.f32.gmra.mxu0 %v2007
        %v2035 = vpop.f32.mrf.mxu0
        %v2036 = vadd.f32 0.0, %v2035
        %2037 = vdwg.mxu0
        %v2038 = vmul.f32 %v2027, %v399
        %v2039 = vmul.f32 %v2030, %v400
        %v2040 = vmul.f32 %v2033, %v401
        %v2041 = vmul.f32 %v2036, %v402
        %v2043 = vsel %vm509, %v2038, 0
        %v2046 = vsel %vm509, %v2039, 0
        %v2049 = vsel %vm509, %v2040, 0
        %v2052 = vsel %vm509, %v2041, 0
        %2054 = vmatpush.msra.mxu0 0.0
        %2055 = vmatpush.msra.mxu0 0.0
        %2056 = vmatpush.msra.mxu0 0.0
        %2057 = vmatpush.msra.mxu0 0.0
        %2058 = vmatpush.msra.mxu0 0.0
        %2059 = vmatpush.msra.mxu0 0.0
        %2060 = vmatpush.msra.mxu0 0.0
        %2061 = vmatpush.msra.mxu0 0.0
        %2062 = vmatpush.msra.mxu0 %v459
        %2063 = vmatpush.msra.mxu0 %v458
        %2064 = vmatpush.msra.mxu0 %v457
        %2065 = vmatpush.msra.mxu0 %v456
        %2066 = vmatpush.msra.mxu0 %v455
        %2067 = vmatpush.msra.mxu0 %v454
        %2068 = vmatpush.msra.mxu0 %v453
        %2069 = vmatpush.msra.mxu0 %v452
        %2070 = vmatmul.f32.gmra.mxu0 %v2043
        %v2071 = vpop.f32.mrf.mxu0
        %v2072 = vadd.f32 0.0, %v2071
        %2073 = vmatmul.f32.gmra.mxu0 %v2046
        %v2074 = vpop.f32.mrf.mxu0
        %v2075 = vadd.f32 0.0, %v2074
        %2076 = vmatmul.f32.gmra.mxu0 %v2049
        %v2077 = vpop.f32.mrf.mxu0
        %v2078 = vadd.f32 0.0, %v2077
        %2079 = vmatmul.f32.gmra.mxu0 %v2052
        %v2080 = vpop.f32.mrf.mxu0
        %v2081 = vadd.f32 0.0, %v2080
        %2082 = vdwg.mxu0
        %v2083 = vperm.slane %v464, 0
        %v2085 = vsel %vm1931, %v451, 0
        %2087 = vmatpush.msra.mxu0 0.0
        %2088 = vmatpush.msra.mxu0 0.0
        %2089 = vmatpush.msra.mxu0 0.0
        %2090 = vmatpush.msra.mxu0 0.0
        %2091 = vmatpush.msra.mxu0 0.0
        %2092 = vmatpush.msra.mxu0 0.0
        %2093 = vmatpush.msra.mxu0 0.0
        %2094 = vmatpush.msra.mxu0 0.0
        %2095 = vmatpush.msra.mxu0 0.0
        %2096 = vmatpush.msra.mxu0 0.0
        %2097 = vmatpush.msra.mxu0 0.0
        %2098 = vmatpush.msra.mxu0 0.0
        %2099 = vmatpush.msra.mxu0 %v2081
        %2100 = vmatpush.msra.mxu0 %v2078
        %2101 = vmatpush.msra.mxu0 %v2075
        %2102 = vmatpush.msra.mxu0 %v2072
        %2103 = vmatmul.f32.gmra.mxu0 %v2085
        %v2104 = vpop.f32.mrf.mxu0
        %v2105 = vadd.f32 %v2083, %v2104
        %2106 = vdwg.mxu0
        %vm2107 = vcmask 25600
        %v2108 = vsel %vm2107, %v2105, -inf
        %2109 = vmax.xlane.f32.xlu0 %v2108
        %v2110 = vpop.xlane.xlu0 %2109
        %v2111 = vsub.f32 %v2105, %v2110
        %v2112 = vmul.f32 %v2111, 1.442695
        %v2113 = vpow.pop %v2112
        %v2114 = vsel %vm2107, %v2113, 0.0
        %2115 = vadd.xlane.f32.xlu0 %v2114
        %v2116 = vpop.xlane.xlu0 %2115
        %v2117 = vlog2.pop %v2116
        %v2118 = vmul.f32 %v2117, 0.6931472
        %v2119 = vsub.f32 %v2111, %v2118
        %2120 = vst.msk [vmem:[%s271] sm:$0x3] %vm2107, %v2119
        %s2121 = sand.u32 %s181, 1
        %s2122 = scalar_lea.sflag [#allocation3], %s2121
        %s2123 = sand.u32 %s181, 1
        %s2124 = smul.addr %s2123, 2
        %s2125 = scalar_lea.vmem [#allocation2], %s2124
        // Predicated region
        $region49: #{eegnet_forward.1} parent=47 // pred_check
          %p2126 = pneg %p191
        $region50: #{eegnet_forward.1} parent=47 // pred_check_branch
          %2128 = sbr.rel (%p2126) target = $region52
        $region51: #{eegnet_forward.1} parent=47 // pred_region
          %2130 = vsyncadd %s2122, 0
          %s2131 = smul.addr %s21, 2
          %s2132 = scalar_lea.hbm %s7, %s2131
          %s2134 = sshll.u32 %s2125, 4
          %s2135 = int_to_ptr.vmem [resolvable:$true] %s2134
          %s2136 = sshll.u32 %s2132, 4
          %s2137 = int_to_ptr.hbm [resolvable:$true] %s2136
          %2139 = dma.vmem_to_hbm [thread:$0]  %s2135, 32, %s2137, %s2122
        $region52: #{eegnet_forward.1} parent=47 // pred_fallthru
          _
      $region48: #{eegnet_forward.1} parent=5 // pred_fallthru
        _
      %p2140 = scmp.le.s32.totalorder 2, %s16
      // Predicated region
      $region53: #{eegnet_forward.1} parent=5 // pred_check
        %p2141 = pneg %p2140
      $region54: #{eegnet_forward.1} parent=5 // pred_check_branch
        %2143 = sbr.rel (%p2141) target = $region56
      $region55: #{eegnet_forward.1} parent=5 // pred_region
        %s2144 = ssub.s32 %s16, 2
        // Predicated region
        $region57: #{eegnet_forward.1} parent=55 // pred_check
          %p2145 = pneg %p197
        $region58: #{eegnet_forward.1} parent=55 // pred_check_branch
          %2147 = sbr.rel (%p2145) target = $region60
        $region59: #{eegnet_forward.1} parent=55 // pred_region
          %s2148 = sand.u32 %s182, 1
          %s2149 = scalar_lea.sflag [#allocation3], %s2148
          %s2150 = sand.u32 %s182, 1
          %s2151 = smul.addr %s2150, 2
          %s2152 = scalar_lea.vmem [#allocation2], %s2151
          %2154 = dma.done %s2149, 32
        $region60: #{eegnet_forward.1} parent=55 // pred_fallthru
          _
      $region56: #{eegnet_forward.1} parent=5 // pred_fallthru
        _
    $region6: #{eegnet_forward.1} parent=1 // loop_footer
      %s20 = sadd.s32 1, %s16
    $region7: #{eegnet_forward.1} parent=1 // loop_footer_branch
      %15 = sbr.rel target = $region3
    $region8: #{eegnet_forward.1} parent=1 // loop_exit
      _
    %2155 = vsyncpa [#allocation3], 1
    %s2156 = scalar_lea.sflag [#allocation3], 1
    %2157 = vsyncpa %s2156, 1

</llo_original>
